<compile_context>
chip_gen: v5e
topology: v5e:2x2
jax: 0.10.0
libtpu: 0.0.40
codegen_flags: <defaults>
</compile_context>

<pallas_src>
import math
import functools

import jax
import jax.numpy as jnp
from jax import lax
from jax.experimental import pallas as pl
from jax.experimental.pallas import tpu as pltpu


# ---------------------------------------------------------------------------
# in-kernel helpers
# ---------------------------------------------------------------------------
def _layernorm(x, a, b, eps=1e-6):
    # Annotated-transformer LayerNorm: a*(x-mean)/(std+eps)+b, torch unbiased std.
    # Single EUP rsqrt (eps folded inside the sqrt -> O(eps) deviation).
    d = x.shape[-1]
    mean = jnp.mean(x, axis=-1, keepdims=True)
    diff = x - mean
    var = jnp.sum(diff * diff, axis=-1, keepdims=True) * (1.0 / (d - 1))
    return a * diff * lax.rsqrt(var + eps) + b


# ---------------------------------------------------------------------------
# single fused kernel: embed + PE + mask + all layers + final LN + classifier
# ---------------------------------------------------------------------------
def text_encoder_kernel(src_rows_ref, src_lanes_ref, embed_ref, pe_ref,
                        ln1a_ref, ln1b_ref,
                        wq_ref, bq_ref, wk_ref, bk_ref, wv_ref, bv_ref,
                        wo_ref, bo_ref,
                        ln2a_ref, ln2b_ref, w1_ref, b1_ref, w2_ref, b2_ref,
                        flna_ref, flnb_ref, wc_ref, bc_ref,
                        feats_ref, labels_ref,
                        *, num_heads, seq_len, items_per_step):
    R = src_rows_ref.shape[0]                 # rows this step = items_per_step * S
    Vp = embed_ref.shape[0]                   # (sublane-padded) vocab
    D = embed_ref.shape[1]
    d_k = D // num_heads
    num_layers = wq_ref.shape[0]

    # ---- embedding (one-hot @ table; sqrt(D) prefolded) + positional encoding
    tok_rows = src_rows_ref[...]                                     # (R, 1) int32
    onehot = (tok_rows == lax.broadcasted_iota(jnp.int32, (R, Vp), 1)
              ).astype(jnp.float32)                                  # (R, Vp)
    pe = pe_ref[0:seq_len, :]                                        # (S, D)
    if items_per_step > 1:
        pe = jnp.concatenate([pe] * items_per_step, axis=0)          # (R, D)
    x = jnp.dot(onehot, embed_ref[...], preferred_element_type=jnp.float32) + pe

    # ---- additive attention mask built in-kernel from the token ids
    # keep = (tok != pad/eos) | (position == 0); block-diagonal across sequences.
    tok_lanes = src_lanes_ref[0]                                     # (1, R) int32
    lane_pos = lax.broadcasted_iota(jnp.int32, (1, R), 1)
    keep = (tok_lanes != 0) | ((lane_pos % seq_len) == 0)            # (1, R) bool
    if items_per_step > 1:
        row_seq = lax.broadcasted_iota(jnp.int32, (R, R), 0) // seq_len
        col_seq = lax.broadcasted_iota(jnp.int32, (R, R), 1) // seq_len
        madd = jnp.where((row_seq == col_seq) & keep, 0.0, -1e9)     # (R, R)
    else:
        madd = jnp.where(keep, 0.0, -1e9)                            # (1, R)

    # ---- encoder layers (static unroll; fine at small L)
    for li in range(num_layers):
        # self-attention sublayer: x + SelfAttn(LN(x))
        xn = _layernorm(x, ln1a_ref[li], ln1b_ref[li])
        q_all = jnp.dot(xn, wq_ref[li], preferred_element_type=jnp.float32) + bq_ref[li]
        k_all = jnp.dot(xn, wk_ref[li], preferred_element_type=jnp.float32) + bk_ref[li]
        v_all = jnp.dot(xn, wv_ref[li], preferred_element_type=jnp.float32) + bv_ref[li]

        ctxs = []
        for hi in range(num_heads):                 # static unroll over heads
            lo = hi * d_k
            q = q_all[:, lo:lo + d_k]
            k = k_all[:, lo:lo + d_k]
            v = v_all[:, lo:lo + d_k]
            # scale already folded into Wq/bq; rhs-transposed contraction on MXU
            s = lax.dot_general(q, k, (((1,), (1,)), ((), ())),
                                preferred_element_type=jnp.float32) + madd
            s = s - jnp.max(s, axis=-1, keepdims=True)
            p = jnp.exp(s)
            p = p * pl.reciprocal(jnp.sum(p, axis=-1, keepdims=True), approx=True)
            ctxs.append(jnp.dot(p, v, preferred_element_type=jnp.float32))
        ctx_all = jnp.concatenate(ctxs, axis=-1)                     # (R, D)
        x = x + jnp.dot(ctx_all, wo_ref[li],
                        preferred_element_type=jnp.float32) + bo_ref[li]

        # feed-forward sublayer: x + FFN(LN(x))
        xn2 = _layernorm(x, ln2a_ref[li], ln2b_ref[li])
        h1 = jnp.maximum(
            jnp.dot(xn2, w1_ref[li], preferred_element_type=jnp.float32) + b1_ref[li],
            0.0)
        x = x + jnp.dot(h1, w2_ref[li], preferred_element_type=jnp.float32) + b2_ref[li]

    # ---- final LayerNorm + feats + CLS classifier (lane-padded to 128 outputs)
    xn = _layernorm(x, flna_ref[...], flnb_ref[...])
    feats_ref[...] = xn
    if items_per_step > 1:
        pooled = jnp.concatenate(
            [xn[i * seq_len:i * seq_len + 1, :] for i in range(items_per_step)],
            axis=0)                                                  # (items, D)
    else:
        pooled = xn[0:1, :]
    labels_ref[0] = (jnp.dot(pooled, wc_ref[...],
                             preferred_element_type=jnp.float32) + bc_ref[...])


# ---------------------------------------------------------------------------
# wrapper
# ---------------------------------------------------------------------------
def _choose_fold(batch, seq_len):
    """Largest per-step batch fold that still leaves >= 2 grid steps (v7x: both
    TensorCores busy) and keeps the per-step row count sublane-aligned."""
    best = None
    for d in range(1, batch + 1):
        if batch % d:
            continue
        if (batch // d) >= 2 and (d * seq_len) % 8 == 0:
            best = d
    if best is None:
        return batch, 1          # single fused step (block == full array)
    return best, batch // best


def run_text_encoder(src, p, num_heads):
    B, S = src.shape
    Vp, D = p["embed"].shape
    L = p["wq"].shape[0]
    d_ff = p["w1"].shape[-1]
    LP = p["wc"].shape[-1]                       # lane-padded classifier width
    max_len = p["pe"].shape[0]

    ips, G = _choose_fold(B, S)
    R = ips * S

    # the ONLY remaining wrapper glue: two trivial reshapes of the int32 tokens
    src_rows = src.reshape(B * S, 1)             # row-oriented (for embedding)
    src_lanes = src.reshape(G, 1, R)             # lane-oriented (for the mask)

    def rep(shape):  # weight replicated across the grid (constant block index)
        return pl.BlockSpec(shape, lambda g, n=len(shape): (0,) * n)

    kernel = functools.partial(text_encoder_kernel, num_heads=num_heads,
                               seq_len=S, items_per_step=ips)
    feats, labels = pl.pallas_call(
        kernel,
        out_shape=(jax.ShapeDtypeStruct((B * S, D), jnp.float32),
                   jax.ShapeDtypeStruct((G, ips, LP), jnp.float32)),
        grid=(G,),
        in_specs=[
            pl.BlockSpec((R, 1), lambda g: (g, 0)),          # tokens (rows)
            pl.BlockSpec((1, 1, R), lambda g: (g, 0, 0)),    # tokens (lanes)
            rep((Vp, D)), rep((max_len, D)),                 # embed*sqrt(D), PE
            rep((L, 1, D)), rep((L, 1, D)),                  # ln1 a / b
            rep((L, D, D)), rep((L, 1, D)),                  # Wq (scale folded) / bq
            rep((L, D, D)), rep((L, 1, D)),                  # Wk / bk
            rep((L, D, D)), rep((L, 1, D)),                  # Wv / bv
            rep((L, D, D)), rep((L, 1, D)),                  # Wo / bo
            rep((L, 1, D)), rep((L, 1, D)),                  # ln2 a / b
            rep((L, D, d_ff)), rep((L, 1, d_ff)),            # W1 / b1
            rep((L, d_ff, D)), rep((L, 1, D)),               # W2 / b2
            rep((1, D)), rep((1, D)),                        # final LN a / b
            rep((D, LP)), rep((1, LP)),                      # classifier (padded)
        ],
        out_specs=(pl.BlockSpec((R, D), lambda g: (g, 0)),
                   pl.BlockSpec((1, ips, LP), lambda g: (g, 0, 0))),
        compiler_params=pltpu.CompilerParams(dimension_semantics=("parallel",)),
    )(src_rows, src_lanes, p["embed"], p["pe"],
      p["ln1_a"], p["ln1_b"], p["wq"], p["bq"], p["wk"], p["bk"], p["wv"], p["bv"],
      p["wo"], p["bo"], p["ln2_a"], p["ln2_b"], p["w1"], p["b1"], p["w2"], p["b2"],
      p["final_ln_a"], p["final_ln_b"], p["wc"], p["bc"])
    return feats.reshape(B, S, D), labels.reshape(B, LP)


def text_encoder_forward(src, params, num_heads):
    feats, labels_full = run_text_encoder(src, params, num_heads)
    pooled = feats[:, 0, :]
    labels = labels_full[:, :params["num_labels"]]
    return feats, pooled, labels


# ---------------------------------------------------------------------------
# parameters (deterministic synthetic init, layer-stacked, kernel-ready layout)
# ---------------------------------------------------------------------------
def init_params(key, d_model, d_ff, num_layers, tgt_vocab, num_labels, num_heads,
                max_len=64):
    def normal(k, shape, scale=0.02):
        return scale * jax.random.normal(k, shape, dtype=jnp.float32)

    d_k = d_model // num_heads
    scale = 1.0 / math.sqrt(d_k)
    vocab_pad = ((tgt_vocab + 7) // 8) * 8
    lp = max(128, ((num_labels + 127) // 128) * 128)

    keys = jax.random.split(key, 2 + num_layers)

    # embedding table, pre-scaled by sqrt(d_model), rows padded to a sublane mult.
    embed = normal(keys[0], (tgt_vocab, d_model)) * math.sqrt(d_model)
    embed = jnp.concatenate(
        [embed, jnp.zeros((vocab_pad - tgt_vocab, d_model), jnp.float32)], axis=0)

    # classifier, lane-padded to 128 outputs (wrapper slices back to num_labels)
    wc = normal(keys[1], (d_model, num_labels))
    wc = jnp.concatenate(
        [wc, jnp.zeros((d_model, lp - num_labels), jnp.float32)], axis=1)
    bc = jnp.zeros((1, lp), jnp.float32)

    # sinusoidal positional encoding
    pos = jnp.arange(max_len, dtype=jnp.float32)[:, None]
    div = jnp.exp(jnp.arange(0, d_model, 2, dtype=jnp.float32)
                  * (-math.log(10000.0) / d_model))
    pe = jnp.zeros((max_len, d_model), jnp.float32)
    pe = pe.at[:, 0::2].set(jnp.sin(pos * div))
    pe = pe.at[:, 1::2].set(jnp.cos(pos * div))

    params = {
        "embed": embed, "pe": pe, "wc": wc, "bc": bc, "num_labels": num_labels,
        "final_ln_a": jnp.ones((1, d_model), jnp.float32),
        "final_ln_b": jnp.zeros((1, d_model), jnp.float32),
    }

    # Per-layer weights stacked along a leading num_layers axis.  From a torch
    # checkpoint: wq = linear_q.weight.T * (1/sqrt(d_k)), bq = linear_q.bias * (..),
    # wk/wv/wo/w1/w2 = weight.T, biases unchanged (scale folded into Q only).
    ln1a, ln1b = [], []
    wq, bq, wk, bk, wv, bv, wo, bo = [], [], [], [], [], [], [], []
    ln2a, ln2b, w1, b1, w2, b2 = [], [], [], [], [], []
    for li in range(num_layers):
        lk = jax.random.split(keys[2 + li], 6)
        ln1a.append(jnp.ones((1, d_model), jnp.float32))
        ln1b.append(jnp.zeros((1, d_model), jnp.float32))
        wq.append(normal(lk[0], (d_model, d_model)) * scale)
        bq.append(jnp.zeros((1, d_model), jnp.float32) * scale)
        wk.append(normal(lk[1], (d_model, d_model)))
        bk.append(jnp.zeros((1, d_model), jnp.float32))
        wv.append(normal(lk[2], (d_model, d_model)))
        bv.append(jnp.zeros((1, d_model), jnp.float32))
        wo.append(normal(lk[3], (d_model, d_model)))
        bo.append(jnp.zeros((1, d_model), jnp.float32))
        ln2a.append(jnp.ones((1, d_model), jnp.float32))
        ln2b.append(jnp.zeros((1, d_model), jnp.float32))
        w1.append(normal(lk[4], (d_model, d_ff)))
        b1.append(jnp.zeros((1, d_ff), jnp.float32))
        w2.append(normal(lk[5], (d_ff, d_model)))
        b2.append(jnp.zeros((1, d_model), jnp.float32))
    params.update(
        ln1_a=jnp.stack(ln1a), ln1_b=jnp.stack(ln1b),
        wq=jnp.stack(wq), bq=jnp.stack(bq), wk=jnp.stack(wk), bk=jnp.stack(bk),
        wv=jnp.stack(wv), bv=jnp.stack(bv), wo=jnp.stack(wo), bo=jnp.stack(bo),
        ln2_a=jnp.stack(ln2a), ln2_b=jnp.stack(ln2b),
        w1=jnp.stack(w1), b1=jnp.stack(b1), w2=jnp.stack(w2), b2=jnp.stack(b2),
    )
    return params


if __name__ == "__main__":
    d_model, d_ff, num_layers, tgt_vocab, num_labels, h = 48, 96, 2, 50, 14, 3
    B, S = 2, 8

    key = jax.random.PRNGKey(0)
    pkey, skey = jax.random.split(key)
    params = init_params(pkey, d_model, d_ff, num_layers, tgt_vocab, num_labels, h)
    src = jax.random.randint(skey, (B, S), 0, tgt_vocab, dtype=jnp.int32)

    feats, pooled, labels = text_encoder_forward(src, params, h)
    jax.block_until_ready((feats, pooled, labels))

    assert feats.shape == (B, S, d_model)
    assert pooled.shape == (B, d_model)
    assert labels.shape == (B, num_labels)
    assert bool(jnp.all(jnp.isfinite(feats))) and bool(jnp.all(jnp.isfinite(labels)))
    print("KERNEL_OK")
</pallas_src>

<mosaic_0001>
module attributes {stable_mosaic.version = 11 : i64} {
  func.func @text_encoder_kernel(%arg0: i32, %arg1: memref<8x1xi32, #tpu.memory_space<vmem>>, %arg2: memref<1x1x8xi32, #tpu.memory_space<vmem>>, %arg3: memref<56x48xf32, #tpu.memory_space<vmem>>, %arg4: memref<64x48xf32, #tpu.memory_space<vmem>>, %arg5: memref<2x1x48xf32, #tpu.memory_space<vmem>>, %arg6: memref<2x1x48xf32, #tpu.memory_space<vmem>>, %arg7: memref<2x48x48xf32, #tpu.memory_space<vmem>>, %arg8: memref<2x1x48xf32, #tpu.memory_space<vmem>>, %arg9: memref<2x48x48xf32, #tpu.memory_space<vmem>>, %arg10: memref<2x1x48xf32, #tpu.memory_space<vmem>>, %arg11: memref<2x48x48xf32, #tpu.memory_space<vmem>>, %arg12: memref<2x1x48xf32, #tpu.memory_space<vmem>>, %arg13: memref<2x48x48xf32, #tpu.memory_space<vmem>>, %arg14: memref<2x1x48xf32, #tpu.memory_space<vmem>>, %arg15: memref<2x1x48xf32, #tpu.memory_space<vmem>>, %arg16: memref<2x1x48xf32, #tpu.memory_space<vmem>>, %arg17: memref<2x48x96xf32, #tpu.memory_space<vmem>>, %arg18: memref<2x1x96xf32, #tpu.memory_space<vmem>>, %arg19: memref<2x96x48xf32, #tpu.memory_space<vmem>>, %arg20: memref<2x1x48xf32, #tpu.memory_space<vmem>>, %arg21: memref<1x48xf32, #tpu.memory_space<vmem>>, %arg22: memref<1x48xf32, #tpu.memory_space<vmem>>, %arg23: memref<48x128xf32, #tpu.memory_space<vmem>>, %arg24: memref<1x128xf32, #tpu.memory_space<vmem>>, %arg25: memref<8x48xf32, #tpu.memory_space<vmem>>, %arg26: memref<1x1x128xf32, #tpu.memory_space<vmem>>) attributes {dimension_semantics = [#tpu.dimension_semantics<parallel>], iteration_bounds = array<i64: 2>, scalar_prefetch = 0 : i64, scratch_operands = 0 : i64, tpu.core_type = #tpu.core_type<tc>, window_params = [{transform_indices = @transform_0, window_bounds = array<i64: 8, 1>}, {transform_indices = @transform_1, window_bounds = array<i64: 1, 1, 8>}, {pipeline_mode = #tpu.pipeline_mode<synchronous>, transform_indices = @transform_2, window_bounds = array<i64: 56, 48>}, {pipeline_mode = #tpu.pipeline_mode<synchronous>, transform_indices = @transform_3, window_bounds = array<i64: 64, 48>}, {pipeline_mode = #tpu.pipeline_mode<synchronous>, transform_indices = @transform_4, window_bounds = array<i64: 2, 1, 48>}, {pipeline_mode = #tpu.pipeline_mode<synchronous>, transform_indices = @transform_5, window_bounds = array<i64: 2, 1, 48>}, {pipeline_mode = #tpu.pipeline_mode<synchronous>, transform_indices = @transform_6, window_bounds = array<i64: 2, 48, 48>}, {pipeline_mode = #tpu.pipeline_mode<synchronous>, transform_indices = @transform_7, window_bounds = array<i64: 2, 1, 48>}, {pipeline_mode = #tpu.pipeline_mode<synchronous>, transform_indices = @transform_8, window_bounds = array<i64: 2, 48, 48>}, {pipeline_mode = #tpu.pipeline_mode<synchronous>, transform_indices = @transform_9, window_bounds = array<i64: 2, 1, 48>}, {pipeline_mode = #tpu.pipeline_mode<synchronous>, transform_indices = @transform_10, window_bounds = array<i64: 2, 48, 48>}, {pipeline_mode = #tpu.pipeline_mode<synchronous>, transform_indices = @transform_11, window_bounds = array<i64: 2, 1, 48>}, {pipeline_mode = #tpu.pipeline_mode<synchronous>, transform_indices = @transform_12, window_bounds = array<i64: 2, 48, 48>}, {pipeline_mode = #tpu.pipeline_mode<synchronous>, transform_indices = @transform_13, window_bounds = array<i64: 2, 1, 48>}, {pipeline_mode = #tpu.pipeline_mode<synchronous>, transform_indices = @transform_14, window_bounds = array<i64: 2, 1, 48>}, {pipeline_mode = #tpu.pipeline_mode<synchronous>, transform_indices = @transform_15, window_bounds = array<i64: 2, 1, 48>}, {pipeline_mode = #tpu.pipeline_mode<synchronous>, transform_indices = @transform_16, window_bounds = array<i64: 2, 48, 96>}, {pipeline_mode = #tpu.pipeline_mode<synchronous>, transform_indices = @transform_17, window_bounds = array<i64: 2, 1, 96>}, {pipeline_mode = #tpu.pipeline_mode<synchronous>, transform_indices = @transform_18, window_bounds = array<i64: 2, 96, 48>}, {pipeline_mode = #tpu.pipeline_mode<synchronous>, transform_indices = @transform_19, window_bounds = array<i64: 2, 1, 48>}, {pipeline_mode = #tpu.pipeline_mode<synchronous>, transform_indices = @transform_20, window_bounds = array<i64: 1, 48>}, {pipeline_mode = #tpu.pipeline_mode<synchronous>, transform_indices = @transform_21, window_bounds = array<i64: 1, 48>}, {pipeline_mode = #tpu.pipeline_mode<synchronous>, transform_indices = @transform_22, window_bounds = array<i64: 48, 128>}, {pipeline_mode = #tpu.pipeline_mode<synchronous>, transform_indices = @transform_23, window_bounds = array<i64: 1, 128>}, {transform_indices = @transform_24, window_bounds = array<i64: 8, 48>}, {transform_indices = @transform_25, window_bounds = array<i64: 1, 1, 128>}]} {
    %c0 = arith.constant 0 : index
    %c0_0 = arith.constant 0 : index
    %0 = vector.load %arg1[%c0, %c0_0] : memref<8x1xi32, #tpu.memory_space<vmem>>, vector<8x1xi32>
    %1 = tpu.iota {dimensions = array<i32: 1>} : vector<8x56xi32>
    %2 = vector.broadcast %0 : vector<8x1xi32> to vector<8x56xi32>
    %3 = arith.cmpi eq, %2, %1 : vector<8x56xi32>
    %4 = arith.extui %3 : vector<8x56xi1> to vector<8x56xi32>
    %5 = arith.sitofp %4 : vector<8x56xi32> to vector<8x56xf32>
    %c0_1 = arith.constant 0 : index
    %c0_2 = arith.constant 0 : index
    %6 = vector.load %arg4[%c0_1, %c0_2] : memref<64x48xf32, #tpu.memory_space<vmem>>, vector<8x48xf32>
    %c0_3 = arith.constant 0 : index
    %c0_4 = arith.constant 0 : index
    %7 = vector.load %arg3[%c0_3, %c0_4] : memref<56x48xf32, #tpu.memory_space<vmem>>, vector<56x48xf32>
    %cst = arith.constant dense<0.000000e+00> : vector<8x48xf32>
    %8 = tpu.matmul %5, %7, %cst {dimension_numbers = #tpu.dot_dimension_numbers<[1], [0], [0], [1], [0, 0, 1, 1], [], []>} : vector<8x56xf32>, vector<56x48xf32>, vector<8x48xf32> -> vector<8x48xf32>
    %9 = arith.addf %8, %6 : vector<8x48xf32>
    %c0_5 = arith.constant 0 : index
    %c0_6 = arith.constant 0 : index
    %c0_7 = arith.constant 0 : index
    %10 = vector.load %arg2[%c0_5, %c0_6, %c0_7] : memref<1x1x8xi32, #tpu.memory_space<vmem>>, vector<1x1x8xi32>
    %11 = vector.shape_cast %10 : vector<1x1x8xi32> to vector<1x8xi32>
    %12 = tpu.iota {dimensions = array<i32: 1>} : vector<1x8xi32>
    %c0_i32 = arith.constant 0 : i32
    %13 = vector.broadcast %c0_i32 : i32 to vector<1x8xi32>
    %14 = arith.cmpi ne, %11, %13 : vector<1x8xi32>
    %c8_i32 = arith.constant 8 : i32
    %c0_i32_8 = arith.constant 0 : i32
    %15 = arith.cmpi eq, %c8_i32, %c0_i32_8 : i32
    %c1_i32 = arith.constant 1 : i32
    %16 = arith.select %15, %c1_i32, %c8_i32 : i32
    %17 = vector.broadcast %16 : i32 to vector<1x8xi32>
    %18 = arith.remsi %12, %17 : vector<1x8xi32>
    %c0_i32_9 = arith.constant 0 : i32
    %19 = vector.broadcast %c0_i32_9 : i32 to vector<1x8xi32>
    %20 = arith.cmpi ne, %18, %19 : vector<1x8xi32>
    %c0_i32_10 = arith.constant 0 : i32
    %21 = vector.broadcast %c0_i32_10 : i32 to vector<1x8xi32>
    %22 = arith.cmpi slt, %18, %21 : vector<1x8xi32>
    %c0_i32_11 = arith.constant 0 : i32
    %23 = arith.cmpi slt, %16, %c0_i32_11 : i32
    %24 = vector.broadcast %23 : i1 to vector<1x8xi1>
    %25 = vector.broadcast %24 : vector<1x8xi1> to vector<1x8xi1>
    %26 = arith.xori %22, %25 : vector<1x8xi1>
    %27 = arith.andi %26, %20 : vector<1x8xi1>
    %28 = vector.broadcast %16 : i32 to vector<1x8xi32>
    %29 = arith.addi %18, %28 : vector<1x8xi32>
    %30 = arith.select %27, %29, %18 : vector<1x8xi1>, vector<1x8xi32>
    %c0_i32_12 = arith.constant 0 : i32
    %31 = vector.broadcast %c0_i32_12 : i32 to vector<1x8xi32>
    %32 = arith.cmpi eq, %30, %31 : vector<1x8xi32>
    %33 = arith.ori %14, %32 : vector<1x8xi1>
    %cst_13 = arith.constant 0.000000e+00 : f32
    %cst_14 = arith.constant -1.000000e+09 : f32
    %34 = vector.broadcast %cst_13 : f32 to vector<1x8xf32>
    %35 = vector.broadcast %cst_14 : f32 to vector<1x8xf32>
    %36 = arith.select %33, %34, %35 : vector<1x8xi1>, vector<1x8xf32>
    %c0_15 = arith.constant 0 : index
    %c0_16 = arith.constant 0 : index
    %c0_17 = arith.constant 0 : index
    %37 = vector.load %arg5[%c0_15, %c0_16, %c0_17] : memref<2x1x48xf32, #tpu.memory_space<vmem>>, vector<1x1x48xf32>
    %38 = vector.shape_cast %37 : vector<1x1x48xf32> to vector<1x48xf32>
    %c0_18 = arith.constant 0 : index
    %c0_19 = arith.constant 0 : index
    %c0_20 = arith.constant 0 : index
    %39 = vector.load %arg6[%c0_18, %c0_19, %c0_20] : memref<2x1x48xf32, #tpu.memory_space<vmem>>, vector<1x1x48xf32>
    %40 = vector.shape_cast %39 : vector<1x1x48xf32> to vector<1x48xf32>
    %cst_21 = arith.constant dense<0.000000e+00> : vector<8xf32>
    %41 = vector.multi_reduction <add>, %9, %cst_21 [1] : vector<8x48xf32> to vector<8xf32>
    %42 = vector.shape_cast %41 : vector<8xf32> to vector<8x1xf32>
    %cst_22 = arith.constant 4.800000e+01 : f32
    %43 = vector.broadcast %cst_22 : f32 to vector<8x1xf32>
    %44 = arith.divf %42, %43 : vector<8x1xf32>
    %45 = vector.broadcast %44 : vector<8x1xf32> to vector<8x48xf32>
    %46 = arith.subf %9, %45 : vector<8x48xf32>
    %47 = arith.mulf %46, %46 : vector<8x48xf32>
    %cst_23 = arith.constant dense<0.000000e+00> : vector<8xf32>
    %48 = vector.multi_reduction <add>, %47, %cst_23 [1] : vector<8x48xf32> to vector<8xf32>
    %49 = vector.shape_cast %48 : vector<8xf32> to vector<8x1xf32>
    %cst_24 = arith.constant 0.0212765951 : f32
    %50 = vector.broadcast %cst_24 : f32 to vector<8x1xf32>
    %51 = arith.mulf %49, %50 : vector<8x1xf32>
    %52 = vector.broadcast %38 : vector<1x48xf32> to vector<8x48xf32>
    %53 = arith.mulf %52, %46 : vector<8x48xf32>
    %cst_25 = arith.constant 9.99999997E-7 : f32
    %54 = vector.broadcast %cst_25 : f32 to vector<8x1xf32>
    %55 = arith.addf %51, %54 : vector<8x1xf32>
    %56 = math.rsqrt %55 : vector<8x1xf32>
    %57 = vector.broadcast %56 : vector<8x1xf32> to vector<8x48xf32>
    %58 = arith.mulf %53, %57 : vector<8x48xf32>
    %59 = vector.broadcast %40 : vector<1x48xf32> to vector<8x48xf32>
    %60 = arith.addf %58, %59 : vector<8x48xf32>
    %c0_26 = arith.constant 0 : index
    %c0_27 = arith.constant 0 : index
    %c0_28 = arith.constant 0 : index
    %61 = vector.load %arg7[%c0_26, %c0_27, %c0_28] : memref<2x48x48xf32, #tpu.memory_space<vmem>>, vector<1x48x48xf32>
    %62 = vector.shape_cast %61 : vector<1x48x48xf32> to vector<48x48xf32>
    %cst_29 = arith.constant dense<0.000000e+00> : vector<8x48xf32>
    %63 = tpu.matmul %60, %62, %cst_29 {dimension_numbers = #tpu.dot_dimension_numbers<[1], [0], [0], [1], [0, 0, 1, 1], [], []>} : vector<8x48xf32>, vector<48x48xf32>, vector<8x48xf32> -> vector<8x48xf32>
    %c0_30 = arith.constant 0 : index
    %c0_31 = arith.constant 0 : index
    %c0_32 = arith.constant 0 : index
    %64 = vector.load %arg8[%c0_30, %c0_31, %c0_32] : memref<2x1x48xf32, #tpu.memory_space<vmem>>, vector<1x1x48xf32>
    %65 = vector.shape_cast %64 : vector<1x1x48xf32> to vector<1x48xf32>
    %66 = vector.broadcast %65 : vector<1x48xf32> to vector<8x48xf32>
    %67 = arith.addf %63, %66 : vector<8x48xf32>
    %c0_33 = arith.constant 0 : index
    %c0_34 = arith.constant 0 : index
    %c0_35 = arith.constant 0 : index
    %68 = vector.load %arg9[%c0_33, %c0_34, %c0_35] : memref<2x48x48xf32, #tpu.memory_space<vmem>>, vector<1x48x48xf32>
    %69 = vector.shape_cast %68 : vector<1x48x48xf32> to vector<48x48xf32>
    %cst_36 = arith.constant dense<0.000000e+00> : vector<8x48xf32>
    %70 = tpu.matmul %60, %69, %cst_36 {dimension_numbers = #tpu.dot_dimension_numbers<[1], [0], [0], [1], [0, 0, 1, 1], [], []>} : vector<8x48xf32>, vector<48x48xf32>, vector<8x48xf32> -> vector<8x48xf32>
    %c0_37 = arith.constant 0 : index
    %c0_38 = arith.constant 0 : index
    %c0_39 = arith.constant 0 : index
    %71 = vector.load %arg10[%c0_37, %c0_38, %c0_39] : memref<2x1x48xf32, #tpu.memory_space<vmem>>, vector<1x1x48xf32>
    %72 = vector.shape_cast %71 : vector<1x1x48xf32> to vector<1x48xf32>
    %73 = vector.broadcast %72 : vector<1x48xf32> to vector<8x48xf32>
    %74 = arith.addf %70, %73 : vector<8x48xf32>
    %c0_40 = arith.constant 0 : index
    %c0_41 = arith.constant 0 : index
    %c0_42 = arith.constant 0 : index
    %75 = vector.load %arg11[%c0_40, %c0_41, %c0_42] : memref<2x48x48xf32, #tpu.memory_space<vmem>>, vector<1x48x48xf32>
    %76 = vector.shape_cast %75 : vector<1x48x48xf32> to vector<48x48xf32>
    %cst_43 = arith.constant dense<0.000000e+00> : vector<8x48xf32>
    %77 = tpu.matmul %60, %76, %cst_43 {dimension_numbers = #tpu.dot_dimension_numbers<[1], [0], [0], [1], [0, 0, 1, 1], [], []>} : vector<8x48xf32>, vector<48x48xf32>, vector<8x48xf32> -> vector<8x48xf32>
    %c0_44 = arith.constant 0 : index
    %c0_45 = arith.constant 0 : index
    %c0_46 = arith.constant 0 : index
    %78 = vector.load %arg12[%c0_44, %c0_45, %c0_46] : memref<2x1x48xf32, #tpu.memory_space<vmem>>, vector<1x1x48xf32>
    %79 = vector.shape_cast %78 : vector<1x1x48xf32> to vector<1x48xf32>
    %80 = vector.broadcast %79 : vector<1x48xf32> to vector<8x48xf32>
    %81 = arith.addf %77, %80 : vector<8x48xf32>
    %82 = vector.extract_strided_slice %67 {offsets = [0, 0], sizes = [8, 16], strides = [1, 1]} : vector<8x48xf32> to vector<8x16xf32>
    %83 = vector.extract_strided_slice %74 {offsets = [0, 0], sizes = [8, 16], strides = [1, 1]} : vector<8x48xf32> to vector<8x16xf32>
    %84 = vector.extract_strided_slice %81 {offsets = [0, 0], sizes = [8, 16], strides = [1, 1]} : vector<8x48xf32> to vector<8x16xf32>
    %cst_47 = arith.constant dense<0.000000e+00> : vector<8x8xf32>
    %85 = tpu.matmul %82, %83, %cst_47 {dimension_numbers = #tpu.dot_dimension_numbers<[1], [1], [0], [0], [0, 0, 1, 0], [], []>} : vector<8x16xf32>, vector<8x16xf32>, vector<8x8xf32> -> vector<8x8xf32>
    %86 = vector.broadcast %36 : vector<1x8xf32> to vector<8x8xf32>
    %87 = arith.addf %85, %86 : vector<8x8xf32>
    %cst_48 = arith.constant dense<0xFF800000> : vector<8xf32>
    %88 = vector.multi_reduction <maximumf>, %87, %cst_48 [1] : vector<8x8xf32> to vector<8xf32>
    %89 = vector.shape_cast %88 : vector<8xf32> to vector<8x1xf32>
    %90 = vector.broadcast %89 : vector<8x1xf32> to vector<8x8xf32>
    %91 = arith.subf %87, %90 : vector<8x8xf32>
    %92 = math.exp %91 : vector<8x8xf32>
    %cst_49 = arith.constant dense<0.000000e+00> : vector<8xf32>
    %93 = vector.multi_reduction <add>, %92, %cst_49 [1] : vector<8x8xf32> to vector<8xf32>
    %94 = vector.shape_cast %93 : vector<8xf32> to vector<8x1xf32>
    %95 = tpu.reciprocal %94 {approx = true} : vector<8x1xf32> -> vector<8x1xf32>
    %96 = vector.broadcast %95 : vector<8x1xf32> to vector<8x8xf32>
    %97 = arith.mulf %92, %96 : vector<8x8xf32>
    %cst_50 = arith.constant dense<0.000000e+00> : vector<8x16xf32>
    %98 = tpu.matmul %97, %84, %cst_50 {dimension_numbers = #tpu.dot_dimension_numbers<[1], [0], [0], [1], [0, 0, 1, 1], [], []>} : vector<8x8xf32>, vector<8x16xf32>, vector<8x16xf32> -> vector<8x16xf32>
    %99 = vector.extract_strided_slice %67 {offsets = [0, 16], sizes = [8, 16], strides = [1, 1]} : vector<8x48xf32> to vector<8x16xf32>
    %100 = vector.extract_strided_slice %74 {offsets = [0, 16], sizes = [8, 16], strides = [1, 1]} : vector<8x48xf32> to vector<8x16xf32>
    %101 = vector.extract_strided_slice %81 {offsets = [0, 16], sizes = [8, 16], strides = [1, 1]} : vector<8x48xf32> to vector<8x16xf32>
    %cst_51 = arith.constant dense<0.000000e+00> : vector<8x8xf32>
    %102 = tpu.matmul %99, %100, %cst_51 {dimension_numbers = #tpu.dot_dimension_numbers<[1], [1], [0], [0], [0, 0, 1, 0], [], []>} : vector<8x16xf32>, vector<8x16xf32>, vector<8x8xf32> -> vector<8x8xf32>
    %103 = vector.broadcast %36 : vector<1x8xf32> to vector<8x8xf32>
    %104 = arith.addf %102, %103 : vector<8x8xf32>
    %cst_52 = arith.constant dense<0xFF800000> : vector<8xf32>
    %105 = vector.multi_reduction <maximumf>, %104, %cst_52 [1] : vector<8x8xf32> to vector<8xf32>
    %106 = vector.shape_cast %105 : vector<8xf32> to vector<8x1xf32>
    %107 = vector.broadcast %106 : vector<8x1xf32> to vector<8x8xf32>
    %108 = arith.subf %104, %107 : vector<8x8xf32>
    %109 = math.exp %108 : vector<8x8xf32>
    %cst_53 = arith.constant dense<0.000000e+00> : vector<8xf32>
    %110 = vector.multi_reduction <add>, %109, %cst_53 [1] : vector<8x8xf32> to vector<8xf32>
    %111 = vector.shape_cast %110 : vector<8xf32> to vector<8x1xf32>
    %112 = tpu.reciprocal %111 {approx = true} : vector<8x1xf32> -> vector<8x1xf32>
    %113 = vector.broadcast %112 : vector<8x1xf32> to vector<8x8xf32>
    %114 = arith.mulf %109, %113 : vector<8x8xf32>
    %cst_54 = arith.constant dense<0.000000e+00> : vector<8x16xf32>
    %115 = tpu.matmul %114, %101, %cst_54 {dimension_numbers = #tpu.dot_dimension_numbers<[1], [0], [0], [1], [0, 0, 1, 1], [], []>} : vector<8x8xf32>, vector<8x16xf32>, vector<8x16xf32> -> vector<8x16xf32>
    %116 = vector.extract_strided_slice %67 {offsets = [0, 32], sizes = [8, 16], strides = [1, 1]} : vector<8x48xf32> to vector<8x16xf32>
    %117 = vector.extract_strided_slice %74 {offsets = [0, 32], sizes = [8, 16], strides = [1, 1]} : vector<8x48xf32> to vector<8x16xf32>
    %118 = vector.extract_strided_slice %81 {offsets = [0, 32], sizes = [8, 16], strides = [1, 1]} : vector<8x48xf32> to vector<8x16xf32>
    %cst_55 = arith.constant dense<0.000000e+00> : vector<8x8xf32>
    %119 = tpu.matmul %116, %117, %cst_55 {dimension_numbers = #tpu.dot_dimension_numbers<[1], [1], [0], [0], [0, 0, 1, 0], [], []>} : vector<8x16xf32>, vector<8x16xf32>, vector<8x8xf32> -> vector<8x8xf32>
    %120 = vector.broadcast %36 : vector<1x8xf32> to vector<8x8xf32>
    %121 = arith.addf %119, %120 : vector<8x8xf32>
    %cst_56 = arith.constant dense<0xFF800000> : vector<8xf32>
    %122 = vector.multi_reduction <maximumf>, %121, %cst_56 [1] : vector<8x8xf32> to vector<8xf32>
    %123 = vector.shape_cast %122 : vector<8xf32> to vector<8x1xf32>
    %124 = vector.broadcast %123 : vector<8x1xf32> to vector<8x8xf32>
    %125 = arith.subf %121, %124 : vector<8x8xf32>
    %126 = math.exp %125 : vector<8x8xf32>
    %cst_57 = arith.constant dense<0.000000e+00> : vector<8xf32>
    %127 = vector.multi_reduction <add>, %126, %cst_57 [1] : vector<8x8xf32> to vector<8xf32>
    %128 = vector.shape_cast %127 : vector<8xf32> to vector<8x1xf32>
    %129 = tpu.reciprocal %128 {approx = true} : vector<8x1xf32> -> vector<8x1xf32>
    %130 = vector.broadcast %129 : vector<8x1xf32> to vector<8x8xf32>
    %131 = arith.mulf %126, %130 : vector<8x8xf32>
    %cst_58 = arith.constant dense<0.000000e+00> : vector<8x16xf32>
    %132 = tpu.matmul %131, %118, %cst_58 {dimension_numbers = #tpu.dot_dimension_numbers<[1], [0], [0], [1], [0, 0, 1, 1], [], []>} : vector<8x8xf32>, vector<8x16xf32>, vector<8x16xf32> -> vector<8x16xf32>
    %133 = tpu.concatenate %98, %115, %132 in 1 : vector<8x16xf32>, vector<8x16xf32>, vector<8x16xf32> -> vector<8x48xf32>
    %c0_59 = arith.constant 0 : index
    %c0_60 = arith.constant 0 : index
    %c0_61 = arith.constant 0 : index
    %134 = vector.load %arg13[%c0_59, %c0_60, %c0_61] : memref<2x48x48xf32, #tpu.memory_space<vmem>>, vector<1x48x48xf32>
    %135 = vector.shape_cast %134 : vector<1x48x48xf32> to vector<48x48xf32>
    %cst_62 = arith.constant dense<0.000000e+00> : vector<8x48xf32>
    %136 = tpu.matmul %133, %135, %cst_62 {dimension_numbers = #tpu.dot_dimension_numbers<[1], [0], [0], [1], [0, 0, 1, 1], [], []>} : vector<8x48xf32>, vector<48x48xf32>, vector<8x48xf32> -> vector<8x48xf32>
    %137 = arith.addf %9, %136 : vector<8x48xf32>
    %c0_63 = arith.constant 0 : index
    %c0_64 = arith.constant 0 : index
    %c0_65 = arith.constant 0 : index
    %138 = vector.load %arg14[%c0_63, %c0_64, %c0_65] : memref<2x1x48xf32, #tpu.memory_space<vmem>>, vector<1x1x48xf32>
    %139 = vector.shape_cast %138 : vector<1x1x48xf32> to vector<1x48xf32>
    %140 = vector.broadcast %139 : vector<1x48xf32> to vector<8x48xf32>
    %141 = arith.addf %137, %140 : vector<8x48xf32>
    %c0_66 = arith.constant 0 : index
    %c0_67 = arith.constant 0 : index
    %c0_68 = arith.constant 0 : index
    %142 = vector.load %arg15[%c0_66, %c0_67, %c0_68] : memref<2x1x48xf32, #tpu.memory_space<vmem>>, vector<1x1x48xf32>
    %143 = vector.shape_cast %142 : vector<1x1x48xf32> to vector<1x48xf32>
    %c0_69 = arith.constant 0 : index
    %c0_70 = arith.constant 0 : index
    %c0_71 = arith.constant 0 : index
    %144 = vector.load %arg16[%c0_69, %c0_70, %c0_71] : memref<2x1x48xf32, #tpu.memory_space<vmem>>, vector<1x1x48xf32>
    %145 = vector.shape_cast %144 : vector<1x1x48xf32> to vector<1x48xf32>
    %cst_72 = arith.constant dense<0.000000e+00> : vector<8xf32>
    %146 = vector.multi_reduction <add>, %141, %cst_72 [1] : vector<8x48xf32> to vector<8xf32>
    %147 = vector.shape_cast %146 : vector<8xf32> to vector<8x1xf32>
    %cst_73 = arith.constant 4.800000e+01 : f32
    %148 = vector.broadcast %cst_73 : f32 to vector<8x1xf32>
    %149 = arith.divf %147, %148 : vector<8x1xf32>
    %150 = vector.broadcast %149 : vector<8x1xf32> to vector<8x48xf32>
    %151 = arith.subf %141, %150 : vector<8x48xf32>
    %152 = arith.mulf %151, %151 : vector<8x48xf32>
    %cst_74 = arith.constant dense<0.000000e+00> : vector<8xf32>
    %153 = vector.multi_reduction <add>, %152, %cst_74 [1] : vector<8x48xf32> to vector<8xf32>
    %154 = vector.shape_cast %153 : vector<8xf32> to vector<8x1xf32>
    %cst_75 = arith.constant 0.0212765951 : f32
    %155 = vector.broadcast %cst_75 : f32 to vector<8x1xf32>
    %156 = arith.mulf %154, %155 : vector<8x1xf32>
    %157 = vector.broadcast %143 : vector<1x48xf32> to vector<8x48xf32>
    %158 = arith.mulf %157, %151 : vector<8x48xf32>
    %cst_76 = arith.constant 9.99999997E-7 : f32
    %159 = vector.broadcast %cst_76 : f32 to vector<8x1xf32>
    %160 = arith.addf %156, %159 : vector<8x1xf32>
    %161 = math.rsqrt %160 : vector<8x1xf32>
    %162 = vector.broadcast %161 : vector<8x1xf32> to vector<8x48xf32>
    %163 = arith.mulf %158, %162 : vector<8x48xf32>
    %164 = vector.broadcast %145 : vector<1x48xf32> to vector<8x48xf32>
    %165 = arith.addf %163, %164 : vector<8x48xf32>
    %c0_77 = arith.constant 0 : index
    %c0_78 = arith.constant 0 : index
    %c0_79 = arith.constant 0 : index
    %166 = vector.load %arg17[%c0_77, %c0_78, %c0_79] : memref<2x48x96xf32, #tpu.memory_space<vmem>>, vector<1x48x96xf32>
    %167 = vector.shape_cast %166 : vector<1x48x96xf32> to vector<48x96xf32>
    %cst_80 = arith.constant dense<0.000000e+00> : vector<8x96xf32>
    %168 = tpu.matmul %165, %167, %cst_80 {dimension_numbers = #tpu.dot_dimension_numbers<[1], [0], [0], [1], [0, 0, 1, 1], [], []>} : vector<8x48xf32>, vector<48x96xf32>, vector<8x96xf32> -> vector<8x96xf32>
    %c0_81 = arith.constant 0 : index
    %c0_82 = arith.constant 0 : index
    %c0_83 = arith.constant 0 : index
    %169 = vector.load %arg18[%c0_81, %c0_82, %c0_83] : memref<2x1x96xf32, #tpu.memory_space<vmem>>, vector<1x1x96xf32>
    %170 = vector.shape_cast %169 : vector<1x1x96xf32> to vector<1x96xf32>
    %171 = vector.broadcast %170 : vector<1x96xf32> to vector<8x96xf32>
    %172 = arith.addf %168, %171 : vector<8x96xf32>
    %cst_84 = arith.constant 0.000000e+00 : f32
    %173 = vector.broadcast %cst_84 : f32 to vector<8x96xf32>
    %174 = arith.maximumf %172, %173 : vector<8x96xf32>
    %c0_85 = arith.constant 0 : index
    %c0_86 = arith.constant 0 : index
    %c0_87 = arith.constant 0 : index
    %175 = vector.load %arg19[%c0_85, %c0_86, %c0_87] : memref<2x96x48xf32, #tpu.memory_space<vmem>>, vector<1x96x48xf32>
    %176 = vector.shape_cast %175 : vector<1x96x48xf32> to vector<96x48xf32>
    %cst_88 = arith.constant dense<0.000000e+00> : vector<8x48xf32>
    %177 = tpu.matmul %174, %176, %cst_88 {dimension_numbers = #tpu.dot_dimension_numbers<[1], [0], [0], [1], [0, 0, 1, 1], [], []>} : vector<8x96xf32>, vector<96x48xf32>, vector<8x48xf32> -> vector<8x48xf32>
    %178 = arith.addf %141, %177 : vector<8x48xf32>
    %c0_89 = arith.constant 0 : index
    %c0_90 = arith.constant 0 : index
    %c0_91 = arith.constant 0 : index
    %179 = vector.load %arg20[%c0_89, %c0_90, %c0_91] : memref<2x1x48xf32, #tpu.memory_space<vmem>>, vector<1x1x48xf32>
    %180 = vector.shape_cast %179 : vector<1x1x48xf32> to vector<1x48xf32>
    %181 = vector.broadcast %180 : vector<1x48xf32> to vector<8x48xf32>
    %182 = arith.addf %178, %181 : vector<8x48xf32>
    %c1 = arith.constant 1 : index
    %c0_92 = arith.constant 0 : index
    %c0_93 = arith.constant 0 : index
    %183 = vector.load %arg5[%c1, %c0_92, %c0_93] : memref<2x1x48xf32, #tpu.memory_space<vmem>>, vector<1x1x48xf32>
    %184 = vector.shape_cast %183 : vector<1x1x48xf32> to vector<1x48xf32>
    %c1_94 = arith.constant 1 : index
    %c0_95 = arith.constant 0 : index
    %c0_96 = arith.constant 0 : index
    %185 = vector.load %arg6[%c1_94, %c0_95, %c0_96] : memref<2x1x48xf32, #tpu.memory_space<vmem>>, vector<1x1x48xf32>
    %186 = vector.shape_cast %185 : vector<1x1x48xf32> to vector<1x48xf32>
    %cst_97 = arith.constant dense<0.000000e+00> : vector<8xf32>
    %187 = vector.multi_reduction <add>, %182, %cst_97 [1] : vector<8x48xf32> to vector<8xf32>
    %188 = vector.shape_cast %187 : vector<8xf32> to vector<8x1xf32>
    %cst_98 = arith.constant 4.800000e+01 : f32
    %189 = vector.broadcast %cst_98 : f32 to vector<8x1xf32>
    %190 = arith.divf %188, %189 : vector<8x1xf32>
    %191 = vector.broadcast %190 : vector<8x1xf32> to vector<8x48xf32>
    %192 = arith.subf %182, %191 : vector<8x48xf32>
    %193 = arith.mulf %192, %192 : vector<8x48xf32>
    %cst_99 = arith.constant dense<0.000000e+00> : vector<8xf32>
    %194 = vector.multi_reduction <add>, %193, %cst_99 [1] : vector<8x48xf32> to vector<8xf32>
    %195 = vector.shape_cast %194 : vector<8xf32> to vector<8x1xf32>
    %cst_100 = arith.constant 0.0212765951 : f32
    %196 = vector.broadcast %cst_100 : f32 to vector<8x1xf32>
    %197 = arith.mulf %195, %196 : vector<8x1xf32>
    %198 = vector.broadcast %184 : vector<1x48xf32> to vector<8x48xf32>
    %199 = arith.mulf %198, %192 : vector<8x48xf32>
    %cst_101 = arith.constant 9.99999997E-7 : f32
    %200 = vector.broadcast %cst_101 : f32 to vector<8x1xf32>
    %201 = arith.addf %197, %200 : vector<8x1xf32>
    %202 = math.rsqrt %201 : vector<8x1xf32>
    %203 = vector.broadcast %202 : vector<8x1xf32> to vector<8x48xf32>
    %204 = arith.mulf %199, %203 : vector<8x48xf32>
    %205 = vector.broadcast %186 : vector<1x48xf32> to vector<8x48xf32>
    %206 = arith.addf %204, %205 : vector<8x48xf32>
    %c1_102 = arith.constant 1 : index
    %c0_103 = arith.constant 0 : index
    %c0_104 = arith.constant 0 : index
    %207 = vector.load %arg7[%c1_102, %c0_103, %c0_104] : memref<2x48x48xf32, #tpu.memory_space<vmem>>, vector<1x48x48xf32>
    %208 = vector.shape_cast %207 : vector<1x48x48xf32> to vector<48x48xf32>
    %cst_105 = arith.constant dense<0.000000e+00> : vector<8x48xf32>
    %209 = tpu.matmul %206, %208, %cst_105 {dimension_numbers = #tpu.dot_dimension_numbers<[1], [0], [0], [1], [0, 0, 1, 1], [], []>} : vector<8x48xf32>, vector<48x48xf32>, vector<8x48xf32> -> vector<8x48xf32>
    %c1_106 = arith.constant 1 : index
    %c0_107 = arith.constant 0 : index
    %c0_108 = arith.constant 0 : index
    %210 = vector.load %arg8[%c1_106, %c0_107, %c0_108] : memref<2x1x48xf32, #tpu.memory_space<vmem>>, vector<1x1x48xf32>
    %211 = vector.shape_cast %210 : vector<1x1x48xf32> to vector<1x48xf32>
    %212 = vector.broadcast %211 : vector<1x48xf32> to vector<8x48xf32>
    %213 = arith.addf %209, %212 : vector<8x48xf32>
    %c1_109 = arith.constant 1 : index
    %c0_110 = arith.constant 0 : index
    %c0_111 = arith.constant 0 : index
    %214 = vector.load %arg9[%c1_109, %c0_110, %c0_111] : memref<2x48x48xf32, #tpu.memory_space<vmem>>, vector<1x48x48xf32>
    %215 = vector.shape_cast %214 : vector<1x48x48xf32> to vector<48x48xf32>
    %cst_112 = arith.constant dense<0.000000e+00> : vector<8x48xf32>
    %216 = tpu.matmul %206, %215, %cst_112 {dimension_numbers = #tpu.dot_dimension_numbers<[1], [0], [0], [1], [0, 0, 1, 1], [], []>} : vector<8x48xf32>, vector<48x48xf32>, vector<8x48xf32> -> vector<8x48xf32>
    %c1_113 = arith.constant 1 : index
    %c0_114 = arith.constant 0 : index
    %c0_115 = arith.constant 0 : index
    %217 = vector.load %arg10[%c1_113, %c0_114, %c0_115] : memref<2x1x48xf32, #tpu.memory_space<vmem>>, vector<1x1x48xf32>
    %218 = vector.shape_cast %217 : vector<1x1x48xf32> to vector<1x48xf32>
    %219 = vector.broadcast %218 : vector<1x48xf32> to vector<8x48xf32>
    %220 = arith.addf %216, %219 : vector<8x48xf32>
    %c1_116 = arith.constant 1 : index
    %c0_117 = arith.constant 0 : index
    %c0_118 = arith.constant 0 : index
    %221 = vector.load %arg11[%c1_116, %c0_117, %c0_118] : memref<2x48x48xf32, #tpu.memory_space<vmem>>, vector<1x48x48xf32>
    %222 = vector.shape_cast %221 : vector<1x48x48xf32> to vector<48x48xf32>
    %cst_119 = arith.constant dense<0.000000e+00> : vector<8x48xf32>
    %223 = tpu.matmul %206, %222, %cst_119 {dimension_numbers = #tpu.dot_dimension_numbers<[1], [0], [0], [1], [0, 0, 1, 1], [], []>} : vector<8x48xf32>, vector<48x48xf32>, vector<8x48xf32> -> vector<8x48xf32>
    %c1_120 = arith.constant 1 : index
    %c0_121 = arith.constant 0 : index
    %c0_122 = arith.constant 0 : index
    %224 = vector.load %arg12[%c1_120, %c0_121, %c0_122] : memref<2x1x48xf32, #tpu.memory_space<vmem>>, vector<1x1x48xf32>
    %225 = vector.shape_cast %224 : vector<1x1x48xf32> to vector<1x48xf32>
    %226 = vector.broadcast %225 : vector<1x48xf32> to vector<8x48xf32>
    %227 = arith.addf %223, %226 : vector<8x48xf32>
    %228 = vector.extract_strided_slice %213 {offsets = [0, 0], sizes = [8, 16], strides = [1, 1]} : vector<8x48xf32> to vector<8x16xf32>
    %229 = vector.extract_strided_slice %220 {offsets = [0, 0], sizes = [8, 16], strides = [1, 1]} : vector<8x48xf32> to vector<8x16xf32>
    %230 = vector.extract_strided_slice %227 {offsets = [0, 0], sizes = [8, 16], strides = [1, 1]} : vector<8x48xf32> to vector<8x16xf32>
    %cst_123 = arith.constant dense<0.000000e+00> : vector<8x8xf32>
    %231 = tpu.matmul %228, %229, %cst_123 {dimension_numbers = #tpu.dot_dimension_numbers<[1], [1], [0], [0], [0, 0, 1, 0], [], []>} : vector<8x16xf32>, vector<8x16xf32>, vector<8x8xf32> -> vector<8x8xf32>
    %232 = vector.broadcast %36 : vector<1x8xf32> to vector<8x8xf32>
    %233 = arith.addf %231, %232 : vector<8x8xf32>
    %cst_124 = arith.constant dense<0xFF800000> : vector<8xf32>
    %234 = vector.multi_reduction <maximumf>, %233, %cst_124 [1] : vector<8x8xf32> to vector<8xf32>
    %235 = vector.shape_cast %234 : vector<8xf32> to vector<8x1xf32>
    %236 = vector.broadcast %235 : vector<8x1xf32> to vector<8x8xf32>
    %237 = arith.subf %233, %236 : vector<8x8xf32>
    %238 = math.exp %237 : vector<8x8xf32>
    %cst_125 = arith.constant dense<0.000000e+00> : vector<8xf32>
    %239 = vector.multi_reduction <add>, %238, %cst_125 [1] : vector<8x8xf32> to vector<8xf32>
    %240 = vector.shape_cast %239 : vector<8xf32> to vector<8x1xf32>
    %241 = tpu.reciprocal %240 {approx = true} : vector<8x1xf32> -> vector<8x1xf32>
    %242 = vector.broadcast %241 : vector<8x1xf32> to vector<8x8xf32>
    %243 = arith.mulf %238, %242 : vector<8x8xf32>
    %cst_126 = arith.constant dense<0.000000e+00> : vector<8x16xf32>
    %244 = tpu.matmul %243, %230, %cst_126 {dimension_numbers = #tpu.dot_dimension_numbers<[1], [0], [0], [1], [0, 0, 1, 1], [], []>} : vector<8x8xf32>, vector<8x16xf32>, vector<8x16xf32> -> vector<8x16xf32>
    %245 = vector.extract_strided_slice %213 {offsets = [0, 16], sizes = [8, 16], strides = [1, 1]} : vector<8x48xf32> to vector<8x16xf32>
    %246 = vector.extract_strided_slice %220 {offsets = [0, 16], sizes = [8, 16], strides = [1, 1]} : vector<8x48xf32> to vector<8x16xf32>
    %247 = vector.extract_strided_slice %227 {offsets = [0, 16], sizes = [8, 16], strides = [1, 1]} : vector<8x48xf32> to vector<8x16xf32>
    %cst_127 = arith.constant dense<0.000000e+00> : vector<8x8xf32>
    %248 = tpu.matmul %245, %246, %cst_127 {dimension_numbers = #tpu.dot_dimension_numbers<[1], [1], [0], [0], [0, 0, 1, 0], [], []>} : vector<8x16xf32>, vector<8x16xf32>, vector<8x8xf32> -> vector<8x8xf32>
    %249 = vector.broadcast %36 : vector<1x8xf32> to vector<8x8xf32>
    %250 = arith.addf %248, %249 : vector<8x8xf32>
    %cst_128 = arith.constant dense<0xFF800000> : vector<8xf32>
    %251 = vector.multi_reduction <maximumf>, %250, %cst_128 [1] : vector<8x8xf32> to vector<8xf32>
    %252 = vector.shape_cast %251 : vector<8xf32> to vector<8x1xf32>
    %253 = vector.broadcast %252 : vector<8x1xf32> to vector<8x8xf32>
    %254 = arith.subf %250, %253 : vector<8x8xf32>
    %255 = math.exp %254 : vector<8x8xf32>
    %cst_129 = arith.constant dense<0.000000e+00> : vector<8xf32>
    %256 = vector.multi_reduction <add>, %255, %cst_129 [1] : vector<8x8xf32> to vector<8xf32>
    %257 = vector.shape_cast %256 : vector<8xf32> to vector<8x1xf32>
    %258 = tpu.reciprocal %257 {approx = true} : vector<8x1xf32> -> vector<8x1xf32>
    %259 = vector.broadcast %258 : vector<8x1xf32> to vector<8x8xf32>
    %260 = arith.mulf %255, %259 : vector<8x8xf32>
    %cst_130 = arith.constant dense<0.000000e+00> : vector<8x16xf32>
    %261 = tpu.matmul %260, %247, %cst_130 {dimension_numbers = #tpu.dot_dimension_numbers<[1], [0], [0], [1], [0, 0, 1, 1], [], []>} : vector<8x8xf32>, vector<8x16xf32>, vector<8x16xf32> -> vector<8x16xf32>
    %262 = vector.extract_strided_slice %213 {offsets = [0, 32], sizes = [8, 16], strides = [1, 1]} : vector<8x48xf32> to vector<8x16xf32>
    %263 = vector.extract_strided_slice %220 {offsets = [0, 32], sizes = [8, 16], strides = [1, 1]} : vector<8x48xf32> to vector<8x16xf32>
    %264 = vector.extract_strided_slice %227 {offsets = [0, 32], sizes = [8, 16], strides = [1, 1]} : vector<8x48xf32> to vector<8x16xf32>
    %cst_131 = arith.constant dense<0.000000e+00> : vector<8x8xf32>
    %265 = tpu.matmul %262, %263, %cst_131 {dimension_numbers = #tpu.dot_dimension_numbers<[1], [1], [0], [0], [0, 0, 1, 0], [], []>} : vector<8x16xf32>, vector<8x16xf32>, vector<8x8xf32> -> vector<8x8xf32>
    %266 = vector.broadcast %36 : vector<1x8xf32> to vector<8x8xf32>
    %267 = arith.addf %265, %266 : vector<8x8xf32>
    %cst_132 = arith.constant dense<0xFF800000> : vector<8xf32>
    %268 = vector.multi_reduction <maximumf>, %267, %cst_132 [1] : vector<8x8xf32> to vector<8xf32>
    %269 = vector.shape_cast %268 : vector<8xf32> to vector<8x1xf32>
    %270 = vector.broadcast %269 : vector<8x1xf32> to vector<8x8xf32>
    %271 = arith.subf %267, %270 : vector<8x8xf32>
    %272 = math.exp %271 : vector<8x8xf32>
    %cst_133 = arith.constant dense<0.000000e+00> : vector<8xf32>
    %273 = vector.multi_reduction <add>, %272, %cst_133 [1] : vector<8x8xf32> to vector<8xf32>
    %274 = vector.shape_cast %273 : vector<8xf32> to vector<8x1xf32>
    %275 = tpu.reciprocal %274 {approx = true} : vector<8x1xf32> -> vector<8x1xf32>
    %276 = vector.broadcast %275 : vector<8x1xf32> to vector<8x8xf32>
    %277 = arith.mulf %272, %276 : vector<8x8xf32>
    %cst_134 = arith.constant dense<0.000000e+00> : vector<8x16xf32>
    %278 = tpu.matmul %277, %264, %cst_134 {dimension_numbers = #tpu.dot_dimension_numbers<[1], [0], [0], [1], [0, 0, 1, 1], [], []>} : vector<8x8xf32>, vector<8x16xf32>, vector<8x16xf32> -> vector<8x16xf32>
    %279 = tpu.concatenate %244, %261, %278 in 1 : vector<8x16xf32>, vector<8x16xf32>, vector<8x16xf32> -> vector<8x48xf32>
    %c1_135 = arith.constant 1 : index
    %c0_136 = arith.constant 0 : index
    %c0_137 = arith.constant 0 : index
    %280 = vector.load %arg13[%c1_135, %c0_136, %c0_137] : memref<2x48x48xf32, #tpu.memory_space<vmem>>, vector<1x48x48xf32>
    %281 = vector.shape_cast %280 : vector<1x48x48xf32> to vector<48x48xf32>
    %cst_138 = arith.constant dense<0.000000e+00> : vector<8x48xf32>
    %282 = tpu.matmul %279, %281, %cst_138 {dimension_numbers = #tpu.dot_dimension_numbers<[1], [0], [0], [1], [0, 0, 1, 1], [], []>} : vector<8x48xf32>, vector<48x48xf32>, vector<8x48xf32> -> vector<8x48xf32>
    %283 = arith.addf %182, %282 : vector<8x48xf32>
    %c1_139 = arith.constant 1 : index
    %c0_140 = arith.constant 0 : index
    %c0_141 = arith.constant 0 : index
    %284 = vector.load %arg14[%c1_139, %c0_140, %c0_141] : memref<2x1x48xf32, #tpu.memory_space<vmem>>, vector<1x1x48xf32>
    %285 = vector.shape_cast %284 : vector<1x1x48xf32> to vector<1x48xf32>
    %286 = vector.broadcast %285 : vector<1x48xf32> to vector<8x48xf32>
    %287 = arith.addf %283, %286 : vector<8x48xf32>
    %c1_142 = arith.constant 1 : index
    %c0_143 = arith.constant 0 : index
    %c0_144 = arith.constant 0 : index
    %288 = vector.load %arg15[%c1_142, %c0_143, %c0_144] : memref<2x1x48xf32, #tpu.memory_space<vmem>>, vector<1x1x48xf32>
    %289 = vector.shape_cast %288 : vector<1x1x48xf32> to vector<1x48xf32>
    %c1_145 = arith.constant 1 : index
    %c0_146 = arith.constant 0 : index
    %c0_147 = arith.constant 0 : index
    %290 = vector.load %arg16[%c1_145, %c0_146, %c0_147] : memref<2x1x48xf32, #tpu.memory_space<vmem>>, vector<1x1x48xf32>
    %291 = vector.shape_cast %290 : vector<1x1x48xf32> to vector<1x48xf32>
    %cst_148 = arith.constant dense<0.000000e+00> : vector<8xf32>
    %292 = vector.multi_reduction <add>, %287, %cst_148 [1] : vector<8x48xf32> to vector<8xf32>
    %293 = vector.shape_cast %292 : vector<8xf32> to vector<8x1xf32>
    %cst_149 = arith.constant 4.800000e+01 : f32
    %294 = vector.broadcast %cst_149 : f32 to vector<8x1xf32>
    %295 = arith.divf %293, %294 : vector<8x1xf32>
    %296 = vector.broadcast %295 : vector<8x1xf32> to vector<8x48xf32>
    %297 = arith.subf %287, %296 : vector<8x48xf32>
    %298 = arith.mulf %297, %297 : vector<8x48xf32>
    %cst_150 = arith.constant dense<0.000000e+00> : vector<8xf32>
    %299 = vector.multi_reduction <add>, %298, %cst_150 [1] : vector<8x48xf32> to vector<8xf32>
    %300 = vector.shape_cast %299 : vector<8xf32> to vector<8x1xf32>
    %cst_151 = arith.constant 0.0212765951 : f32
    %301 = vector.broadcast %cst_151 : f32 to vector<8x1xf32>
    %302 = arith.mulf %300, %301 : vector<8x1xf32>
    %303 = vector.broadcast %289 : vector<1x48xf32> to vector<8x48xf32>
    %304 = arith.mulf %303, %297 : vector<8x48xf32>
    %cst_152 = arith.constant 9.99999997E-7 : f32
    %305 = vector.broadcast %cst_152 : f32 to vector<8x1xf32>
    %306 = arith.addf %302, %305 : vector<8x1xf32>
    %307 = math.rsqrt %306 : vector<8x1xf32>
    %308 = vector.broadcast %307 : vector<8x1xf32> to vector<8x48xf32>
    %309 = arith.mulf %304, %308 : vector<8x48xf32>
    %310 = vector.broadcast %291 : vector<1x48xf32> to vector<8x48xf32>
    %311 = arith.addf %309, %310 : vector<8x48xf32>
    %c1_153 = arith.constant 1 : index
    %c0_154 = arith.constant 0 : index
    %c0_155 = arith.constant 0 : index
    %312 = vector.load %arg17[%c1_153, %c0_154, %c0_155] : memref<2x48x96xf32, #tpu.memory_space<vmem>>, vector<1x48x96xf32>
    %313 = vector.shape_cast %312 : vector<1x48x96xf32> to vector<48x96xf32>
    %cst_156 = arith.constant dense<0.000000e+00> : vector<8x96xf32>
    %314 = tpu.matmul %311, %313, %cst_156 {dimension_numbers = #tpu.dot_dimension_numbers<[1], [0], [0], [1], [0, 0, 1, 1], [], []>} : vector<8x48xf32>, vector<48x96xf32>, vector<8x96xf32> -> vector<8x96xf32>
    %c1_157 = arith.constant 1 : index
    %c0_158 = arith.constant 0 : index
    %c0_159 = arith.constant 0 : index
    %315 = vector.load %arg18[%c1_157, %c0_158, %c0_159] : memref<2x1x96xf32, #tpu.memory_space<vmem>>, vector<1x1x96xf32>
    %316 = vector.shape_cast %315 : vector<1x1x96xf32> to vector<1x96xf32>
    %317 = vector.broadcast %316 : vector<1x96xf32> to vector<8x96xf32>
    %318 = arith.addf %314, %317 : vector<8x96xf32>
    %cst_160 = arith.constant 0.000000e+00 : f32
    %319 = vector.broadcast %cst_160 : f32 to vector<8x96xf32>
    %320 = arith.maximumf %318, %319 : vector<8x96xf32>
    %c1_161 = arith.constant 1 : index
    %c0_162 = arith.constant 0 : index
    %c0_163 = arith.constant 0 : index
    %321 = vector.load %arg19[%c1_161, %c0_162, %c0_163] : memref<2x96x48xf32, #tpu.memory_space<vmem>>, vector<1x96x48xf32>
    %322 = vector.shape_cast %321 : vector<1x96x48xf32> to vector<96x48xf32>
    %cst_164 = arith.constant dense<0.000000e+00> : vector<8x48xf32>
    %323 = tpu.matmul %320, %322, %cst_164 {dimension_numbers = #tpu.dot_dimension_numbers<[1], [0], [0], [1], [0, 0, 1, 1], [], []>} : vector<8x96xf32>, vector<96x48xf32>, vector<8x48xf32> -> vector<8x48xf32>
    %324 = arith.addf %287, %323 : vector<8x48xf32>
    %c1_165 = arith.constant 1 : index
    %c0_166 = arith.constant 0 : index
    %c0_167 = arith.constant 0 : index
    %325 = vector.load %arg20[%c1_165, %c0_166, %c0_167] : memref<2x1x48xf32, #tpu.memory_space<vmem>>, vector<1x1x48xf32>
    %326 = vector.shape_cast %325 : vector<1x1x48xf32> to vector<1x48xf32>
    %327 = vector.broadcast %326 : vector<1x48xf32> to vector<8x48xf32>
    %328 = arith.addf %324, %327 : vector<8x48xf32>
    %c0_168 = arith.constant 0 : index
    %c0_169 = arith.constant 0 : index
    %329 = vector.load %arg21[%c0_168, %c0_169] : memref<1x48xf32, #tpu.memory_space<vmem>>, vector<1x48xf32>
    %c0_170 = arith.constant 0 : index
    %c0_171 = arith.constant 0 : index
    %330 = vector.load %arg22[%c0_170, %c0_171] : memref<1x48xf32, #tpu.memory_space<vmem>>, vector<1x48xf32>
    %cst_172 = arith.constant dense<0.000000e+00> : vector<8xf32>
    %331 = vector.multi_reduction <add>, %328, %cst_172 [1] : vector<8x48xf32> to vector<8xf32>
    %332 = vector.shape_cast %331 : vector<8xf32> to vector<8x1xf32>
    %cst_173 = arith.constant 4.800000e+01 : f32
    %333 = vector.broadcast %cst_173 : f32 to vector<8x1xf32>
    %334 = arith.divf %332, %333 : vector<8x1xf32>
    %335 = vector.broadcast %334 : vector<8x1xf32> to vector<8x48xf32>
    %336 = arith.subf %328, %335 : vector<8x48xf32>
    %337 = arith.mulf %336, %336 : vector<8x48xf32>
    %cst_174 = arith.constant dense<0.000000e+00> : vector<8xf32>
    %338 = vector.multi_reduction <add>, %337, %cst_174 [1] : vector<8x48xf32> to vector<8xf32>
    %339 = vector.shape_cast %338 : vector<8xf32> to vector<8x1xf32>
    %cst_175 = arith.constant 0.0212765951 : f32
    %340 = vector.broadcast %cst_175 : f32 to vector<8x1xf32>
    %341 = arith.mulf %339, %340 : vector<8x1xf32>
    %342 = vector.broadcast %329 : vector<1x48xf32> to vector<8x48xf32>
    %343 = arith.mulf %342, %336 : vector<8x48xf32>
    %cst_176 = arith.constant 9.99999997E-7 : f32
    %344 = vector.broadcast %cst_176 : f32 to vector<8x1xf32>
    %345 = arith.addf %341, %344 : vector<8x1xf32>
    %346 = math.rsqrt %345 : vector<8x1xf32>
    %347 = vector.broadcast %346 : vector<8x1xf32> to vector<8x48xf32>
    %348 = arith.mulf %343, %347 : vector<8x48xf32>
    %349 = vector.broadcast %330 : vector<1x48xf32> to vector<8x48xf32>
    %350 = arith.addf %348, %349 : vector<8x48xf32>
    %c0_177 = arith.constant 0 : index
    %c0_178 = arith.constant 0 : index
    %351 = vector.load %arg25[%c0_177, %c0_178] : memref<8x48xf32, #tpu.memory_space<vmem>>, vector<8x48xf32>
    tpu.vector_store %arg25[%c0_177, %c0_178], %350 {strides = array<i32>} : memref<8x48xf32, #tpu.memory_space<vmem>>, vector<8x48xf32>,
    %352 = vector.extract_strided_slice %350 {offsets = [0, 0], sizes = [1, 48], strides = [1, 1]} : vector<8x48xf32> to vector<1x48xf32>
    %c0_179 = arith.constant 0 : index
    %c0_180 = arith.constant 0 : index
    %353 = vector.load %arg23[%c0_179, %c0_180] : memref<48x128xf32, #tpu.memory_space<vmem>>, vector<48x128xf32>
    %cst_181 = arith.constant dense<0.000000e+00> : vector<1x128xf32>
    %354 = tpu.matmul %352, %353, %cst_181 {dimension_numbers = #tpu.dot_dimension_numbers<[1], [0], [0], [1], [0, 0, 1, 1], [], []>} : vector<1x48xf32>, vector<48x128xf32>, vector<1x128xf32> -> vector<1x128xf32>
    %c0_182 = arith.constant 0 : index
    %c0_183 = arith.constant 0 : index
    %355 = vector.load %arg24[%c0_182, %c0_183] : memref<1x128xf32, #tpu.memory_space<vmem>>, vector<1x128xf32>
    %356 = arith.addf %354, %355 : vector<1x128xf32>
    %c0_184 = arith.constant 0 : index
    %c0_185 = arith.constant 0 : index
    %c0_186 = arith.constant 0 : index
    %357 = vector.load %arg26[%c0_184, %c0_185, %c0_186] : memref<1x1x128xf32, #tpu.memory_space<vmem>>, vector<1x1x128xf32>
    %358 = vector.shape_cast %357 : vector<1x1x128xf32> to vector<1x128xf32>
    %359 = vector.shape_cast %356 : vector<1x128xf32> to vector<1x1x128xf32>
    tpu.vector_store %arg26[%c0_184, %c0_185, %c0_186], %359 {strides = array<i32>} : memref<1x1x128xf32, #tpu.memory_space<vmem>>, vector<1x1x128xf32>,
    return
  }
  func.func @transform_0(%arg0: i32) -> (i32, i32) {
    %c0_i32 = arith.constant 0 : i32
    %c0_i32_0 = arith.constant 0 : i32
    return %arg0, %c0_i32 : i32, i32
  }
  func.func @transform_1(%arg0: i32) -> (i32, i32, i32) {
    %c0_i32 = arith.constant 0 : i32
    %c0_i32_0 = arith.constant 0 : i32
    %c0_i32_1 = arith.constant 0 : i32
    return %arg0, %c0_i32, %c0_i32_0 : i32, i32, i32
  }
  func.func @transform_2(%arg0: i32) -> (i32, i32) {
    %c0_i32 = arith.constant 0 : i32
    %c0_i32_0 = arith.constant 0 : i32
    %c0_i32_1 = arith.constant 0 : i32
    return %c0_i32, %c0_i32_0 : i32, i32
  }
  func.func @transform_3(%arg0: i32) -> (i32, i32) {
    %c0_i32 = arith.constant 0 : i32
    %c0_i32_0 = arith.constant 0 : i32
    %c0_i32_1 = arith.constant 0 : i32
    return %c0_i32, %c0_i32_0 : i32, i32
  }
  func.func @transform_4(%arg0: i32) -> (i32, i32, i32) {
    %c0_i32 = arith.constant 0 : i32
    %c0_i32_0 = arith.constant 0 : i32
    %c0_i32_1 = arith.constant 0 : i32
    %c0_i32_2 = arith.constant 0 : i32
    return %c0_i32, %c0_i32_0, %c0_i32_1 : i32, i32, i32
  }
  func.func @transform_5(%arg0: i32) -> (i32, i32, i32) {
    %c0_i32 = arith.constant 0 : i32
    %c0_i32_0 = arith.constant 0 : i32
    %c0_i32_1 = arith.constant 0 : i32
    %c0_i32_2 = arith.constant 0 : i32
    return %c0_i32, %c0_i32_0, %c0_i32_1 : i32, i32, i32
  }
  func.func @transform_6(%arg0: i32) -> (i32, i32, i32) {
    %c0_i32 = arith.constant 0 : i32
    %c0_i32_0 = arith.constant 0 : i32
    %c0_i32_1 = arith.constant 0 : i32
    %c0_i32_2 = arith.constant 0 : i32
    return %c0_i32, %c0_i32_0, %c0_i32_1 : i32, i32, i32
  }
  func.func @transform_7(%arg0: i32) -> (i32, i32, i32) {
    %c0_i32 = arith.constant 0 : i32
    %c0_i32_0 = arith.constant 0 : i32
    %c0_i32_1 = arith.constant 0 : i32
    %c0_i32_2 = arith.constant 0 : i32
    return %c0_i32, %c0_i32_0, %c0_i32_1 : i32, i32, i32
  }
  func.func @transform_8(%arg0: i32) -> (i32, i32, i32) {
    %c0_i32 = arith.constant 0 : i32
    %c0_i32_0 = arith.constant 0 : i32
    %c0_i32_1 = arith.constant 0 : i32
    %c0_i32_2 = arith.constant 0 : i32
    return %c0_i32, %c0_i32_0, %c0_i32_1 : i32, i32, i32
  }
  func.func @transform_9(%arg0: i32) -> (i32, i32, i32) {
    %c0_i32 = arith.constant 0 : i32
    %c0_i32_0 = arith.constant 0 : i32
    %c0_i32_1 = arith.constant 0 : i32
    %c0_i32_2 = arith.constant 0 : i32
    return %c0_i32, %c0_i32_0, %c0_i32_1 : i32, i32, i32
  }
  func.func @transform_10(%arg0: i32) -> (i32, i32, i32) {
    %c0_i32 = arith.constant 0 : i32
    %c0_i32_0 = arith.constant 0 : i32
    %c0_i32_1 = arith.constant 0 : i32
    %c0_i32_2 = arith.constant 0 : i32
    return %c0_i32, %c0_i32_0, %c0_i32_1 : i32, i32, i32
  }
  func.func @transform_11(%arg0: i32) -> (i32, i32, i32) {
    %c0_i32 = arith.constant 0 : i32
    %c0_i32_0 = arith.constant 0 : i32
    %c0_i32_1 = arith.constant 0 : i32
    %c0_i32_2 = arith.constant 0 : i32
    return %c0_i32, %c0_i32_0, %c0_i32_1 : i32, i32, i32
  }
  func.func @transform_12(%arg0: i32) -> (i32, i32, i32) {
    %c0_i32 = arith.constant 0 : i32
    %c0_i32_0 = arith.constant 0 : i32
    %c0_i32_1 = arith.constant 0 : i32
    %c0_i32_2 = arith.constant 0 : i32
    return %c0_i32, %c0_i32_0, %c0_i32_1 : i32, i32, i32
  }
  func.func @transform_13(%arg0: i32) -> (i32, i32, i32) {
    %c0_i32 = arith.constant 0 : i32
    %c0_i32_0 = arith.constant 0 : i32
    %c0_i32_1 = arith.constant 0 : i32
    %c0_i32_2 = arith.constant 0 : i32
    return %c0_i32, %c0_i32_0, %c0_i32_1 : i32, i32, i32
  }
  func.func @transform_14(%arg0: i32) -> (i32, i32, i32) {
    %c0_i32 = arith.constant 0 : i32
    %c0_i32_0 = arith.constant 0 : i32
    %c0_i32_1 = arith.constant 0 : i32
    %c0_i32_2 = arith.constant 0 : i32
    return %c0_i32, %c0_i32_0, %c0_i32_1 : i32, i32, i32
  }
  func.func @transform_15(%arg0: i32) -> (i32, i32, i32) {
    %c0_i32 = arith.constant 0 : i32
    %c0_i32_0 = arith.constant 0 : i32
    %c0_i32_1 = arith.constant 0 : i32
    %c0_i32_2 = arith.constant 0 : i32
    return %c0_i32, %c0_i32_0, %c0_i32_1 : i32, i32, i32
  }
  func.func @transform_16(%arg0: i32) -> (i32, i32, i32) {
    %c0_i32 = arith.constant 0 : i32
    %c0_i32_0 = arith.constant 0 : i32
    %c0_i32_1 = arith.constant 0 : i32
    %c0_i32_2 = arith.constant 0 : i32
    return %c0_i32, %c0_i32_0, %c0_i32_1 : i32, i32, i32
  }
  func.func @transform_17(%arg0: i32) -> (i32, i32, i32) {
    %c0_i32 = arith.constant 0 : i32
    %c0_i32_0 = arith.constant 0 : i32
    %c0_i32_1 = arith.constant 0 : i32
    %c0_i32_2 = arith.constant 0 : i32
    return %c0_i32, %c0_i32_0, %c0_i32_1 : i32, i32, i32
  }
  func.func @transform_18(%arg0: i32) -> (i32, i32, i32) {
    %c0_i32 = arith.constant 0 : i32
    %c0_i32_0 = arith.constant 0 : i32
    %c0_i32_1 = arith.constant 0 : i32
    %c0_i32_2 = arith.constant 0 : i32
    return %c0_i32, %c0_i32_0, %c0_i32_1 : i32, i32, i32
  }
  func.func @transform_19(%arg0: i32) -> (i32, i32, i32) {
    %c0_i32 = arith.constant 0 : i32
    %c0_i32_0 = arith.constant 0 : i32
    %c0_i32_1 = arith.constant 0 : i32
    %c0_i32_2 = arith.constant 0 : i32
    return %c0_i32, %c0_i32_0, %c0_i32_1 : i32, i32, i32
  }
  func.func @transform_20(%arg0: i32) -> (i32, i32) {
    %c0_i32 = arith.constant 0 : i32
    %c0_i32_0 = arith.constant 0 : i32
    %c0_i32_1 = arith.constant 0 : i32
    return %c0_i32, %c0_i32_0 : i32, i32
  }
  func.func @transform_21(%arg0: i32) -> (i32, i32) {
    %c0_i32 = arith.constant 0 : i32
    %c0_i32_0 = arith.constant 0 : i32
    %c0_i32_1 = arith.constant 0 : i32
    return %c0_i32, %c0_i32_0 : i32, i32
  }
  func.func @transform_22(%arg0: i32) -> (i32, i32) {
    %c0_i32 = arith.constant 0 : i32
    %c0_i32_0 = arith.constant 0 : i32
    %c0_i32_1 = arith.constant 0 : i32
    return %c0_i32, %c0_i32_0 : i32, i32
  }
  func.func @transform_23(%arg0: i32) -> (i32, i32) {
    %c0_i32 = arith.constant 0 : i32
    %c0_i32_0 = arith.constant 0 : i32
    %c0_i32_1 = arith.constant 0 : i32
    return %c0_i32, %c0_i32_0 : i32, i32
  }
  func.func @transform_24(%arg0: i32) -> (i32, i32) {
    %c0_i32 = arith.constant 0 : i32
    %c0_i32_0 = arith.constant 0 : i32
    return %arg0, %c0_i32 : i32, i32
  }
  func.func @transform_25(%arg0: i32) -> (i32, i32, i32) {
    %c0_i32 = arith.constant 0 : i32
    %c0_i32_0 = arith.constant 0 : i32
    %c0_i32_1 = arith.constant 0 : i32
    return %arg0, %c0_i32, %c0_i32_0 : i32, i32, i32
  }
}

</mosaic_0001>

<llo_original>
// kernel: tpu_custom_call.1
$region0: #{tpu_custom_call.1}
  #allocation0 [shape = 'u32[]', space=smem, size = 0x4, offset = 0x4, fixed_abs, tag = 'smem constant byte address 0x4 - core index']
  #allocation1 [shape = 'u32[72,128]{1,0:T(1,128)}', space=vmem, size = 0x9000, scoped, tag = 'internal scratch']
  %s0 = inlined_call_operand.vmem [shape: s32[16,1], index: 0, kind: input, shape index: {}]
  %s1 = inlined_call_operand.vmem [shape: s32[2,1,8], index: 1, kind: input, shape index: {}]
  %s2 = inlined_call_operand.vmem [shape: f32[56,48], index: 2, kind: input, shape index: {}]
  %s3 = inlined_call_operand.vmem [shape: f32[64,48], index: 3, kind: input, shape index: {}]
  %s4 = inlined_call_operand.vmem [shape: f32[2,1,48], index: 4, kind: input, shape index: {}]
  %s5 = inlined_call_operand.vmem [shape: f32[2,1,48], index: 5, kind: input, shape index: {}]
  %s6 = inlined_call_operand.vmem [shape: f32[2,48,48], index: 6, kind: input, shape index: {}]
  %s7 = inlined_call_operand.vmem [shape: f32[2,1,48], index: 7, kind: input, shape index: {}]
  %s8 = inlined_call_operand.vmem [shape: f32[2,48,48], index: 8, kind: input, shape index: {}]
  %s9 = inlined_call_operand.vmem [shape: f32[2,1,48], index: 9, kind: input, shape index: {}]
  %s10 = inlined_call_operand.vmem [shape: f32[2,48,48], index: 10, kind: input, shape index: {}]
  %s11 = inlined_call_operand.vmem [shape: f32[2,1,48], index: 11, kind: input, shape index: {}]
  %s12 = inlined_call_operand.hbm [shape: f32[2,48,48], index: 12, kind: input, shape index: {}]
  %s13 = inlined_call_operand.vmem [shape: f32[2,1,48], index: 13, kind: input, shape index: {}]
  %s14 = inlined_call_operand.vmem [shape: f32[2,1,48], index: 14, kind: input, shape index: {}]
  %s15 = inlined_call_operand.vmem [shape: f32[2,1,48], index: 15, kind: input, shape index: {}]
  %s16 = inlined_call_operand.hbm [shape: f32[2,48,96], index: 16, kind: input, shape index: {}]
  %s17 = inlined_call_operand.vmem [shape: f32[2,1,96], index: 17, kind: input, shape index: {}]
  %s18 = inlined_call_operand.vmem [shape: f32[2,96,48], index: 18, kind: input, shape index: {}]
  %s19 = inlined_call_operand.vmem [shape: f32[2,1,48], index: 19, kind: input, shape index: {}]
  %s20 = inlined_call_operand.vmem [shape: f32[1,48], index: 20, kind: input, shape index: {}]
  %s21 = inlined_call_operand.vmem [shape: f32[1,48], index: 21, kind: input, shape index: {}]
  %s22 = inlined_call_operand.vmem [shape: f32[48,128], index: 22, kind: input, shape index: {}]
  %s23 = inlined_call_operand.vmem [shape: f32[1,128], index: 23, kind: input, shape index: {}]
  %s24 = inlined_call_operand.hbm [shape: f32[16,48], index: 24, kind: output, shape index: {0}]
  %s25 = inlined_call_operand.hbm [shape: f32[2,1,128], index: 25, kind: output, shape index: {1}]
  %26 = xla_tuple %s24, %s25
  %s27 = sld [smem:[#allocation0]]
  $region145: #{tpu_custom_call.1} parent=0
    _
  %s29 = ssub.s32 1, %s27
  %s30 = scalar_select 0, %s29, %s27
  $region1: #{tpu_custom_call.1} parent=0
    #allocation2 [shape = 'u8[49152]{0}', space=vmem, size = 0xc000, scoped, tag = 'input window, operand 12, single buffered']
    #allocation3 [shape = 's32[2]{0}', space=sflag, size = 0x8, scoped, tag = 'scoped memory for tpu_custom_call.1']
    #allocation4 [shape = 's32[2]{0}', space=sflag, size = 0x8, scoped, tag = 'scoped memory for tpu_custom_call.1']
    #allocation5 [shape = 'u8[49152]{0}', space=vmem, size = 0xc000, scoped, tag = 'input window, operand 16, single buffered']
    #allocation6 [shape = 's32[1]{0}', space=sflag, size = 0x4, scoped, tag = 'scoped memory for tpu_custom_call.1']
    #allocation7 [shape = 'u8[8192]{0}', space=vmem, size = 0x2000, scoped, tag = 'output window, operand 0']
    #allocation8 [shape = 'u8[1024]{0}', space=vmem, size = 0x400, scoped, tag = 'output window, operand 1']
    #allocation9 [shape = 's32[2]{0}', space=sflag, size = 0x8, scoped, tag = 'scoped memory for tpu_custom_call.1']
    %31 = vsyncpa [#allocation3], 0
    %32 = vsyncpa [#allocation6], 0
    %33 = vsyncpa [#allocation4], 0
    %s34 = scalar_lea.sflag [#allocation4], 1
    %35 = vsyncpa %s34, 0
    %36 = vsyncpa [#allocation9], 0
    %s37 = scalar_lea.sflag [#allocation9], 1
    %38 = vsyncpa %s37, 0
    loop: start=0, step=1, limit=4
    $region2: #{tpu_custom_call.1} parent=1 // loop_pre_header
      _
    $region3: #{tpu_custom_call.1} parent=1 // loop_header
      %s40 = sphi 0, %s44
      %p41 = scmp.ge.s32.totalorder %s40, 4
      %s50 = sphi 0, %s52
      %s53 = sphi 0, %s50
      %s54 = sphi 0, %s53
      %s70 = sphi 0, %s54
      %s76 = sphi 0, %s78
      %s79 = sphi 0, %s76
      %s80 = sphi 0, %s79
      %s96 = sphi 0, %s80
      %s100 = sphi 0, %s100
      %s102 = sphi 0, %s100
      %s103 = sphi 0, %s102
      %s117 = sphi 0, %s103
      %s121 = sphi 0, %s121
      %s123 = sphi 0, %s121
      %s124 = sphi 0, %s123
      %s138 = sphi 0, %s124
      %s142 = sphi 0, %s142
      %s144 = sphi 0, %s142
      %s145 = sphi 0, %s144
      %s159 = sphi 0, %s145
      %s163 = sphi 0, %s163
      %s165 = sphi 0, %s163
      %s166 = sphi 0, %s165
      %s180 = sphi 0, %s166
      %s184 = sphi 0, %s184
      %s186 = sphi 0, %s184
      %s187 = sphi 0, %s186
      %s201 = sphi 0, %s187
      %s205 = sphi 0, %s205
      %s207 = sphi 0, %s205
      %s208 = sphi 0, %s207
      %s222 = sphi 0, %s208
      %s226 = sphi 0, %s226
      %s228 = sphi 0, %s226
      %s229 = sphi 0, %s228
      %s243 = sphi 0, %s229
      %s247 = sphi 0, %s247
      %s249 = sphi 0, %s247
      %s250 = sphi 0, %s249
      %s264 = sphi 0, %s250
      %s268 = sphi 0, %s268
      %s270 = sphi 0, %s268
      %s271 = sphi 0, %s270
      %s285 = sphi 0, %s271
      %s289 = sphi 0, %s289
      %s291 = sphi 0, %s289
      %s292 = sphi 0, %s291
      %s306 = sphi 0, %s292
      %s310 = sphi 0, %s310
      %s312 = sphi 0, %s310
      %s313 = sphi 0, %s312
      %s327 = sphi 0, %s313
      %s331 = sphi 0, %s331
      %s333 = sphi 0, %s331
      %s334 = sphi 0, %s333
      %s348 = sphi 0, %s334
      %s352 = sphi 0, %s352
      %s354 = sphi 0, %s352
      %s355 = sphi 0, %s354
      %s369 = sphi 0, %s355
      %s373 = sphi 0, %s373
      %s375 = sphi 0, %s373
      %s376 = sphi 0, %s375
      %s390 = sphi 0, %s376
      %s394 = sphi 0, %s394
      %s396 = sphi 0, %s394
      %s397 = sphi 0, %s396
      %s411 = sphi 0, %s397
      %s415 = sphi 0, %s415
      %s417 = sphi 0, %s415
      %s418 = sphi 0, %s417
      %s432 = sphi 0, %s418
      %s436 = sphi 0, %s436
      %s438 = sphi 0, %s436
      %s439 = sphi 0, %s438
      %s453 = sphi 0, %s439
      %s457 = sphi 0, %s457
      %s459 = sphi 0, %s457
      %s460 = sphi 0, %s459
      %s474 = sphi 0, %s460
      %s478 = sphi 0, %s478
      %s480 = sphi 0, %s478
      %s481 = sphi 0, %s480
      %s495 = sphi 0, %s481
      %s499 = sphi 0, %s499
      %s501 = sphi 0, %s499
      %s502 = sphi 0, %s501
      %s516 = sphi 0, %s502
      %s520 = sphi 0, %s520
      %s522 = sphi 0, %s520
      %s523 = sphi 0, %s522
      %s537 = sphi 0, %s523
      %s541 = sphi 0, %s541
      %s543 = sphi 0, %s541
      %s544 = sphi 0, %s543
      %s558 = sphi 0, %s544
      %s564 = sphi 0, %s566
      %s567 = sphi 0, %s564
      %s568 = sphi 0, %s567
      %s584 = sphi 0, %s568
      %s590 = sphi 0, %s592
      %s593 = sphi 0, %s590
      %s594 = sphi 0, %s593
      %s610 = sphi 0, %s594
    $region4: #{tpu_custom_call.1} parent=1 // loop_header_branch
      %43 = sbr.rel (%p41) target = $region8
    $region5: #{tpu_custom_call.1} parent=1 // loop_body
      %s45 = ssub.s32 %s40, 1
      %s46 = ssub.s32 %s40, 2
      %s47 = sadd.s32 %s40, 1
      %s48 = ssub.s32 %s40, %s47
      %p49 = scmp.eq.s32.totalorder %s48, 0
      %s51 = sadd.s32 %s50, 1
      %s52 = scalar_select %p49, %s50, %s51
      %p55 = pneg %p49
      %p56 = scmp.eq.s32.totalorder %s40, 1
      %p57 = por %p55, %p56
      %p58 = scmp.ne.s32.totalorder %s50, %s53
      %p59 = scmp.eq.s32.totalorder %s40, 0
      %p60 = por %p58, %p59
      %p61 = scmp.ne.s32.totalorder %s50, %s53
      %p62 = scmp.eq.s32.totalorder %s45, 1
      %p63 = por %p61, %p62
      %p64 = scmp.ne.s32.totalorder %s53, %s54
      %p65 = scmp.eq.s32.totalorder %s45, 0
      %p66 = por %p64, %p65
      %p67 = scmp.ne.s32.totalorder %s53, %s54
      %p68 = scmp.eq.s32.totalorder %s46, 1
      %p69 = por %p67, %p68
      %p71 = scmp.ne.s32.totalorder %s54, %s70
      %p72 = scmp.eq.s32.totalorder %s46, 0
      %p73 = por %p71, %p72
      %s74 = ssub.s32 %s40, %s47
      %p75 = scmp.eq.s32.totalorder %s74, 0
      %s77 = sadd.s32 %s76, 1
      %s78 = scalar_select %p75, %s76, %s77
      %p81 = pneg %p75
      %p82 = scmp.eq.s32.totalorder %s40, 1
      %p83 = por %p81, %p82
      %p84 = scmp.ne.s32.totalorder %s76, %s79
      %p85 = scmp.eq.s32.totalorder %s40, 0
      %p86 = por %p84, %p85
      %p87 = scmp.ne.s32.totalorder %s76, %s79
      %p88 = scmp.eq.s32.totalorder %s45, 1
      %p89 = por %p87, %p88
      %p90 = scmp.ne.s32.totalorder %s79, %s80
      %p91 = scmp.eq.s32.totalorder %s45, 0
      %p92 = por %p90, %p91
      %p93 = scmp.ne.s32.totalorder %s79, %s80
      %p94 = scmp.eq.s32.totalorder %s46, 1
      %p95 = por %p93, %p94
      %p97 = scmp.ne.s32.totalorder %s80, %s96
      %p98 = scmp.eq.s32.totalorder %s46, 0
      %p99 = por %p97, %p98
      %s101 = sadd.s32 %s100, 1
      %p104 = scmp.eq.s32.totalorder %s40, 1
      %p105 = scmp.ne.s32.totalorder %s100, %s102
      %p106 = scmp.eq.s32.totalorder %s40, 0
      %p107 = por %p105, %p106
      %p108 = scmp.ne.s32.totalorder %s100, %s102
      %p109 = scmp.eq.s32.totalorder %s45, 1
      %p110 = por %p108, %p109
      %p111 = scmp.ne.s32.totalorder %s102, %s103
      %p112 = scmp.eq.s32.totalorder %s45, 0
      %p113 = por %p111, %p112
      %p114 = scmp.ne.s32.totalorder %s102, %s103
      %p115 = scmp.eq.s32.totalorder %s46, 1
      %p116 = por %p114, %p115
      %p118 = scmp.ne.s32.totalorder %s103, %s117
      %p119 = scmp.eq.s32.totalorder %s46, 0
      %p120 = por %p118, %p119
      %s122 = sadd.s32 %s121, 1
      %p125 = scmp.eq.s32.totalorder %s40, 1
      %p126 = scmp.ne.s32.totalorder %s121, %s123
      %p127 = scmp.eq.s32.totalorder %s40, 0
      %p128 = por %p126, %p127
      %p129 = scmp.ne.s32.totalorder %s121, %s123
      %p130 = scmp.eq.s32.totalorder %s45, 1
      %p131 = por %p129, %p130
      %p132 = scmp.ne.s32.totalorder %s123, %s124
      %p133 = scmp.eq.s32.totalorder %s45, 0
      %p134 = por %p132, %p133
      %p135 = scmp.ne.s32.totalorder %s123, %s124
      %p136 = scmp.eq.s32.totalorder %s46, 1
      %p137 = por %p135, %p136
      %p139 = scmp.ne.s32.totalorder %s124, %s138
      %p140 = scmp.eq.s32.totalorder %s46, 0
      %p141 = por %p139, %p140
      %s143 = sadd.s32 %s142, 1
      %p146 = scmp.eq.s32.totalorder %s40, 1
      %p147 = scmp.ne.s32.totalorder %s142, %s144
      %p148 = scmp.eq.s32.totalorder %s40, 0
      %p149 = por %p147, %p148
      %p150 = scmp.ne.s32.totalorder %s142, %s144
      %p151 = scmp.eq.s32.totalorder %s45, 1
      %p152 = por %p150, %p151
      %p153 = scmp.ne.s32.totalorder %s144, %s145
      %p154 = scmp.eq.s32.totalorder %s45, 0
      %p155 = por %p153, %p154
      %p156 = scmp.ne.s32.totalorder %s144, %s145
      %p157 = scmp.eq.s32.totalorder %s46, 1
      %p158 = por %p156, %p157
      %p160 = scmp.ne.s32.totalorder %s145, %s159
      %p161 = scmp.eq.s32.totalorder %s46, 0
      %p162 = por %p160, %p161
      %s164 = sadd.s32 %s163, 1
      %p167 = scmp.eq.s32.totalorder %s40, 1
      %p168 = scmp.ne.s32.totalorder %s163, %s165
      %p169 = scmp.eq.s32.totalorder %s40, 0
      %p170 = por %p168, %p169
      %p171 = scmp.ne.s32.totalorder %s163, %s165
      %p172 = scmp.eq.s32.totalorder %s45, 1
      %p173 = por %p171, %p172
      %p174 = scmp.ne.s32.totalorder %s165, %s166
      %p175 = scmp.eq.s32.totalorder %s45, 0
      %p176 = por %p174, %p175
      %p177 = scmp.ne.s32.totalorder %s165, %s166
      %p178 = scmp.eq.s32.totalorder %s46, 1
      %p179 = por %p177, %p178
      %p181 = scmp.ne.s32.totalorder %s166, %s180
      %p182 = scmp.eq.s32.totalorder %s46, 0
      %p183 = por %p181, %p182
      %s185 = sadd.s32 %s184, 1
      %p188 = scmp.eq.s32.totalorder %s40, 1
      %p189 = scmp.ne.s32.totalorder %s184, %s186
      %p190 = scmp.eq.s32.totalorder %s40, 0
      %p191 = por %p189, %p190
      %p192 = scmp.ne.s32.totalorder %s184, %s186
      %p193 = scmp.eq.s32.totalorder %s45, 1
      %p194 = por %p192, %p193
      %p195 = scmp.ne.s32.totalorder %s186, %s187
      %p196 = scmp.eq.s32.totalorder %s45, 0
      %p197 = por %p195, %p196
      %p198 = scmp.ne.s32.totalorder %s186, %s187
      %p199 = scmp.eq.s32.totalorder %s46, 1
      %p200 = por %p198, %p199
      %p202 = scmp.ne.s32.totalorder %s187, %s201
      %p203 = scmp.eq.s32.totalorder %s46, 0
      %p204 = por %p202, %p203
      %s206 = sadd.s32 %s205, 1
      %p209 = scmp.eq.s32.totalorder %s40, 1
      %p210 = scmp.ne.s32.totalorder %s205, %s207
      %p211 = scmp.eq.s32.totalorder %s40, 0
      %p212 = por %p210, %p211
      %p213 = scmp.ne.s32.totalorder %s205, %s207
      %p214 = scmp.eq.s32.totalorder %s45, 1
      %p215 = por %p213, %p214
      %p216 = scmp.ne.s32.totalorder %s207, %s208
      %p217 = scmp.eq.s32.totalorder %s45, 0
      %p218 = por %p216, %p217
      %p219 = scmp.ne.s32.totalorder %s207, %s208
      %p220 = scmp.eq.s32.totalorder %s46, 1
      %p221 = por %p219, %p220
      %p223 = scmp.ne.s32.totalorder %s208, %s222
      %p224 = scmp.eq.s32.totalorder %s46, 0
      %p225 = por %p223, %p224
      %s227 = sadd.s32 %s226, 1
      %p230 = scmp.eq.s32.totalorder %s40, 1
      %p231 = scmp.ne.s32.totalorder %s226, %s228
      %p232 = scmp.eq.s32.totalorder %s40, 0
      %p233 = por %p231, %p232
      %p234 = scmp.ne.s32.totalorder %s226, %s228
      %p235 = scmp.eq.s32.totalorder %s45, 1
      %p236 = por %p234, %p235
      %p237 = scmp.ne.s32.totalorder %s228, %s229
      %p238 = scmp.eq.s32.totalorder %s45, 0
      %p239 = por %p237, %p238
      %p240 = scmp.ne.s32.totalorder %s228, %s229
      %p241 = scmp.eq.s32.totalorder %s46, 1
      %p242 = por %p240, %p241
      %p244 = scmp.ne.s32.totalorder %s229, %s243
      %p245 = scmp.eq.s32.totalorder %s46, 0
      %p246 = por %p244, %p245
      %s248 = sadd.s32 %s247, 1
      %p251 = scmp.eq.s32.totalorder %s40, 1
      %p252 = scmp.ne.s32.totalorder %s247, %s249
      %p253 = scmp.eq.s32.totalorder %s40, 0
      %p254 = por %p252, %p253
      %p255 = scmp.ne.s32.totalorder %s247, %s249
      %p256 = scmp.eq.s32.totalorder %s45, 1
      %p257 = por %p255, %p256
      %p258 = scmp.ne.s32.totalorder %s249, %s250
      %p259 = scmp.eq.s32.totalorder %s45, 0
      %p260 = por %p258, %p259
      %p261 = scmp.ne.s32.totalorder %s249, %s250
      %p262 = scmp.eq.s32.totalorder %s46, 1
      %p263 = por %p261, %p262
      %p265 = scmp.ne.s32.totalorder %s250, %s264
      %p266 = scmp.eq.s32.totalorder %s46, 0
      %p267 = por %p265, %p266
      %s269 = sadd.s32 %s268, 1
      %p272 = scmp.eq.s32.totalorder %s40, 1
      %p273 = scmp.ne.s32.totalorder %s268, %s270
      %p274 = scmp.eq.s32.totalorder %s40, 0
      %p275 = por %p273, %p274
      %p276 = scmp.ne.s32.totalorder %s268, %s270
      %p277 = scmp.eq.s32.totalorder %s45, 1
      %p278 = por %p276, %p277
      %p279 = scmp.ne.s32.totalorder %s270, %s271
      %p280 = scmp.eq.s32.totalorder %s45, 0
      %p281 = por %p279, %p280
      %p282 = scmp.ne.s32.totalorder %s270, %s271
      %p283 = scmp.eq.s32.totalorder %s46, 1
      %p284 = por %p282, %p283
      %p286 = scmp.ne.s32.totalorder %s271, %s285
      %p287 = scmp.eq.s32.totalorder %s46, 0
      %p288 = por %p286, %p287
      %s290 = sadd.s32 %s289, 1
      %p293 = scmp.eq.s32.totalorder %s40, 1
      %p294 = scmp.ne.s32.totalorder %s289, %s291
      %p295 = scmp.eq.s32.totalorder %s40, 0
      %p296 = por %p294, %p295
      %p297 = scmp.ne.s32.totalorder %s289, %s291
      %p298 = scmp.eq.s32.totalorder %s45, 1
      %p299 = por %p297, %p298
      %p300 = scmp.ne.s32.totalorder %s291, %s292
      %p301 = scmp.eq.s32.totalorder %s45, 0
      %p302 = por %p300, %p301
      %p303 = scmp.ne.s32.totalorder %s291, %s292
      %p304 = scmp.eq.s32.totalorder %s46, 1
      %p305 = por %p303, %p304
      %p307 = scmp.ne.s32.totalorder %s292, %s306
      %p308 = scmp.eq.s32.totalorder %s46, 0
      %p309 = por %p307, %p308
      %s311 = sadd.s32 %s310, 1
      %p314 = scmp.eq.s32.totalorder %s40, 1
      %p315 = scmp.ne.s32.totalorder %s310, %s312
      %p316 = scmp.eq.s32.totalorder %s40, 0
      %p317 = por %p315, %p316
      %p318 = scmp.ne.s32.totalorder %s310, %s312
      %p319 = scmp.eq.s32.totalorder %s45, 1
      %p320 = por %p318, %p319
      %p321 = scmp.ne.s32.totalorder %s312, %s313
      %p322 = scmp.eq.s32.totalorder %s45, 0
      %p323 = por %p321, %p322
      %p324 = scmp.ne.s32.totalorder %s312, %s313
      %p325 = scmp.eq.s32.totalorder %s46, 1
      %p326 = por %p324, %p325
      %p328 = scmp.ne.s32.totalorder %s313, %s327
      %p329 = scmp.eq.s32.totalorder %s46, 0
      %p330 = por %p328, %p329
      %s332 = sadd.s32 %s331, 1
      %p335 = scmp.eq.s32.totalorder %s40, 1
      %p336 = scmp.ne.s32.totalorder %s331, %s333
      %p337 = scmp.eq.s32.totalorder %s40, 0
      %p338 = por %p336, %p337
      %p339 = scmp.ne.s32.totalorder %s331, %s333
      %p340 = scmp.eq.s32.totalorder %s45, 1
      %p341 = por %p339, %p340
      %p342 = scmp.ne.s32.totalorder %s333, %s334
      %p343 = scmp.eq.s32.totalorder %s45, 0
      %p344 = por %p342, %p343
      %p345 = scmp.ne.s32.totalorder %s333, %s334
      %p346 = scmp.eq.s32.totalorder %s46, 1
      %p347 = por %p345, %p346
      %p349 = scmp.ne.s32.totalorder %s334, %s348
      %p350 = scmp.eq.s32.totalorder %s46, 0
      %p351 = por %p349, %p350
      %s353 = sadd.s32 %s352, 1
      %p356 = scmp.eq.s32.totalorder %s40, 1
      %p357 = scmp.ne.s32.totalorder %s352, %s354
      %p358 = scmp.eq.s32.totalorder %s40, 0
      %p359 = por %p357, %p358
      %p360 = scmp.ne.s32.totalorder %s352, %s354
      %p361 = scmp.eq.s32.totalorder %s45, 1
      %p362 = por %p360, %p361
      %p363 = scmp.ne.s32.totalorder %s354, %s355
      %p364 = scmp.eq.s32.totalorder %s45, 0
      %p365 = por %p363, %p364
      %p366 = scmp.ne.s32.totalorder %s354, %s355
      %p367 = scmp.eq.s32.totalorder %s46, 1
      %p368 = por %p366, %p367
      %p370 = scmp.ne.s32.totalorder %s355, %s369
      %p371 = scmp.eq.s32.totalorder %s46, 0
      %p372 = por %p370, %p371
      %s374 = sadd.s32 %s373, 1
      %p377 = scmp.eq.s32.totalorder %s40, 1
      %p378 = scmp.ne.s32.totalorder %s373, %s375
      %p379 = scmp.eq.s32.totalorder %s40, 0
      %p380 = por %p378, %p379
      %p381 = scmp.ne.s32.totalorder %s373, %s375
      %p382 = scmp.eq.s32.totalorder %s45, 1
      %p383 = por %p381, %p382
      %p384 = scmp.ne.s32.totalorder %s375, %s376
      %p385 = scmp.eq.s32.totalorder %s45, 0
      %p386 = por %p384, %p385
      %p387 = scmp.ne.s32.totalorder %s375, %s376
      %p388 = scmp.eq.s32.totalorder %s46, 1
      %p389 = por %p387, %p388
      %p391 = scmp.ne.s32.totalorder %s376, %s390
      %p392 = scmp.eq.s32.totalorder %s46, 0
      %p393 = por %p391, %p392
      %s395 = sadd.s32 %s394, 1
      %p398 = scmp.eq.s32.totalorder %s40, 1
      %p399 = scmp.ne.s32.totalorder %s394, %s396
      %p400 = scmp.eq.s32.totalorder %s40, 0
      %p401 = por %p399, %p400
      %p402 = scmp.ne.s32.totalorder %s394, %s396
      %p403 = scmp.eq.s32.totalorder %s45, 1
      %p404 = por %p402, %p403
      %p405 = scmp.ne.s32.totalorder %s396, %s397
      %p406 = scmp.eq.s32.totalorder %s45, 0
      %p407 = por %p405, %p406
      %p408 = scmp.ne.s32.totalorder %s396, %s397
      %p409 = scmp.eq.s32.totalorder %s46, 1
      %p410 = por %p408, %p409
      %p412 = scmp.ne.s32.totalorder %s397, %s411
      %p413 = scmp.eq.s32.totalorder %s46, 0
      %p414 = por %p412, %p413
      %s416 = sadd.s32 %s415, 1
      %p419 = scmp.eq.s32.totalorder %s40, 1
      %p420 = scmp.ne.s32.totalorder %s415, %s417
      %p421 = scmp.eq.s32.totalorder %s40, 0
      %p422 = por %p420, %p421
      %p423 = scmp.ne.s32.totalorder %s415, %s417
      %p424 = scmp.eq.s32.totalorder %s45, 1
      %p425 = por %p423, %p424
      %p426 = scmp.ne.s32.totalorder %s417, %s418
      %p427 = scmp.eq.s32.totalorder %s45, 0
      %p428 = por %p426, %p427
      %p429 = scmp.ne.s32.totalorder %s417, %s418
      %p430 = scmp.eq.s32.totalorder %s46, 1
      %p431 = por %p429, %p430
      %p433 = scmp.ne.s32.totalorder %s418, %s432
      %p434 = scmp.eq.s32.totalorder %s46, 0
      %p435 = por %p433, %p434
      %s437 = sadd.s32 %s436, 1
      %p440 = scmp.eq.s32.totalorder %s40, 1
      %p441 = scmp.ne.s32.totalorder %s436, %s438
      %p442 = scmp.eq.s32.totalorder %s40, 0
      %p443 = por %p441, %p442
      %p444 = scmp.ne.s32.totalorder %s436, %s438
      %p445 = scmp.eq.s32.totalorder %s45, 1
      %p446 = por %p444, %p445
      %p447 = scmp.ne.s32.totalorder %s438, %s439
      %p448 = scmp.eq.s32.totalorder %s45, 0
      %p449 = por %p447, %p448
      %p450 = scmp.ne.s32.totalorder %s438, %s439
      %p451 = scmp.eq.s32.totalorder %s46, 1
      %p452 = por %p450, %p451
      %p454 = scmp.ne.s32.totalorder %s439, %s453
      %p455 = scmp.eq.s32.totalorder %s46, 0
      %p456 = por %p454, %p455
      %s458 = sadd.s32 %s457, 1
      %p461 = scmp.eq.s32.totalorder %s40, 1
      %p462 = scmp.ne.s32.totalorder %s457, %s459
      %p463 = scmp.eq.s32.totalorder %s40, 0
      %p464 = por %p462, %p463
      %p465 = scmp.ne.s32.totalorder %s457, %s459
      %p466 = scmp.eq.s32.totalorder %s45, 1
      %p467 = por %p465, %p466
      %p468 = scmp.ne.s32.totalorder %s459, %s460
      %p469 = scmp.eq.s32.totalorder %s45, 0
      %p470 = por %p468, %p469
      %p471 = scmp.ne.s32.totalorder %s459, %s460
      %p472 = scmp.eq.s32.totalorder %s46, 1
      %p473 = por %p471, %p472
      %p475 = scmp.ne.s32.totalorder %s460, %s474
      %p476 = scmp.eq.s32.totalorder %s46, 0
      %p477 = por %p475, %p476
      %s479 = sadd.s32 %s478, 1
      %p482 = scmp.eq.s32.totalorder %s40, 1
      %p483 = scmp.ne.s32.totalorder %s478, %s480
      %p484 = scmp.eq.s32.totalorder %s40, 0
      %p485 = por %p483, %p484
      %p486 = scmp.ne.s32.totalorder %s478, %s480
      %p487 = scmp.eq.s32.totalorder %s45, 1
      %p488 = por %p486, %p487
      %p489 = scmp.ne.s32.totalorder %s480, %s481
      %p490 = scmp.eq.s32.totalorder %s45, 0
      %p491 = por %p489, %p490
      %p492 = scmp.ne.s32.totalorder %s480, %s481
      %p493 = scmp.eq.s32.totalorder %s46, 1
      %p494 = por %p492, %p493
      %p496 = scmp.ne.s32.totalorder %s481, %s495
      %p497 = scmp.eq.s32.totalorder %s46, 0
      %p498 = por %p496, %p497
      %s500 = sadd.s32 %s499, 1
      %p503 = scmp.eq.s32.totalorder %s40, 1
      %p504 = scmp.ne.s32.totalorder %s499, %s501
      %p505 = scmp.eq.s32.totalorder %s40, 0
      %p506 = por %p504, %p505
      %p507 = scmp.ne.s32.totalorder %s499, %s501
      %p508 = scmp.eq.s32.totalorder %s45, 1
      %p509 = por %p507, %p508
      %p510 = scmp.ne.s32.totalorder %s501, %s502
      %p511 = scmp.eq.s32.totalorder %s45, 0
      %p512 = por %p510, %p511
      %p513 = scmp.ne.s32.totalorder %s501, %s502
      %p514 = scmp.eq.s32.totalorder %s46, 1
      %p515 = por %p513, %p514
      %p517 = scmp.ne.s32.totalorder %s502, %s516
      %p518 = scmp.eq.s32.totalorder %s46, 0
      %p519 = por %p517, %p518
      %s521 = sadd.s32 %s520, 1
      %p524 = scmp.eq.s32.totalorder %s40, 1
      %p525 = scmp.ne.s32.totalorder %s520, %s522
      %p526 = scmp.eq.s32.totalorder %s40, 0
      %p527 = por %p525, %p526
      %p528 = scmp.ne.s32.totalorder %s520, %s522
      %p529 = scmp.eq.s32.totalorder %s45, 1
      %p530 = por %p528, %p529
      %p531 = scmp.ne.s32.totalorder %s522, %s523
      %p532 = scmp.eq.s32.totalorder %s45, 0
      %p533 = por %p531, %p532
      %p534 = scmp.ne.s32.totalorder %s522, %s523
      %p535 = scmp.eq.s32.totalorder %s46, 1
      %p536 = por %p534, %p535
      %p538 = scmp.ne.s32.totalorder %s523, %s537
      %p539 = scmp.eq.s32.totalorder %s46, 0
      %p540 = por %p538, %p539
      %s542 = sadd.s32 %s541, 1
      %p545 = scmp.eq.s32.totalorder %s40, 1
      %p546 = scmp.ne.s32.totalorder %s541, %s543
      %p547 = scmp.eq.s32.totalorder %s40, 0
      %p548 = por %p546, %p547
      %p549 = scmp.ne.s32.totalorder %s541, %s543
      %p550 = scmp.eq.s32.totalorder %s45, 1
      %p551 = por %p549, %p550
      %p552 = scmp.ne.s32.totalorder %s543, %s544
      %p553 = scmp.eq.s32.totalorder %s45, 0
      %p554 = por %p552, %p553
      %p555 = scmp.ne.s32.totalorder %s543, %s544
      %p556 = scmp.eq.s32.totalorder %s46, 1
      %p557 = por %p555, %p556
      %p559 = scmp.ne.s32.totalorder %s544, %s558
      %p560 = scmp.eq.s32.totalorder %s46, 0
      %p561 = por %p559, %p560
      %s562 = ssub.s32 %s40, %s47
      %p563 = scmp.eq.s32.totalorder %s562, 0
      %s565 = sadd.s32 %s564, 1
      %s566 = scalar_select %p563, %s564, %s565
      %p569 = pneg %p563
      %p570 = scmp.eq.s32.totalorder %s40, 1
      %p571 = por %p569, %p570
      %p572 = scmp.ne.s32.totalorder %s564, %s567
      %p573 = scmp.eq.s32.totalorder %s40, 0
      %p574 = por %p572, %p573
      %p575 = scmp.ne.s32.totalorder %s564, %s567
      %p576 = scmp.eq.s32.totalorder %s45, 1
      %p577 = por %p575, %p576
      %p578 = scmp.ne.s32.totalorder %s567, %s568
      %p579 = scmp.eq.s32.totalorder %s45, 0
      %p580 = por %p578, %p579
      %p581 = scmp.ne.s32.totalorder %s567, %s568
      %p582 = scmp.eq.s32.totalorder %s46, 1
      %p583 = por %p581, %p582
      %p585 = scmp.ne.s32.totalorder %s568, %s584
      %p586 = scmp.eq.s32.totalorder %s46, 0
      %p587 = por %p585, %p586
      %s588 = ssub.s32 %s40, %s47
      %p589 = scmp.eq.s32.totalorder %s588, 0
      %s591 = sadd.s32 %s590, 1
      %s592 = scalar_select %p589, %s590, %s591
      %p595 = pneg %p589
      %p596 = scmp.eq.s32.totalorder %s40, 1
      %p597 = por %p595, %p596
      %p598 = scmp.ne.s32.totalorder %s590, %s593
      %p599 = scmp.eq.s32.totalorder %s40, 0
      %p600 = por %p598, %p599
      %p601 = scmp.ne.s32.totalorder %s590, %s593
      %p602 = scmp.eq.s32.totalorder %s45, 1
      %p603 = por %p601, %p602
      %p604 = scmp.ne.s32.totalorder %s593, %s594
      %p605 = scmp.eq.s32.totalorder %s45, 0
      %p606 = por %p604, %p605
      %p607 = scmp.ne.s32.totalorder %s593, %s594
      %p608 = scmp.eq.s32.totalorder %s46, 1
      %p609 = por %p607, %p608
      %p611 = scmp.ne.s32.totalorder %s594, %s610
      %p612 = scmp.eq.s32.totalorder %s46, 0
      %p613 = por %p611, %p612
      %p614 = scmp.le.s32.totalorder 1, %s40
      %p615 = scmp.lt.s32.totalorder %s40, 3
      %p616 = pnand %p614, %p615
      %p617 = pneg %p616
      // Predicated region
      $region9: #{tpu_custom_call.1} parent=5 // pred_check
        _
      $region10: #{tpu_custom_call.1} parent=5 // pred_check_branch
        %619 = sbr.rel (%p616) target = $region12
      $region11: #{tpu_custom_call.1} parent=5 // pred_region
        %s620 = ssub.s32 %s40, 1
        // Predicated region
        $region13: #{tpu_custom_call.1} parent=11 // pred_check
          %p621 = pneg %p113
        $region14: #{tpu_custom_call.1} parent=11 // pred_check_branch
          %623 = sbr.rel (%p621) target = $region16
        $region15: #{tpu_custom_call.1} parent=11 // pred_region
          _
        $region16: #{tpu_custom_call.1} parent=11 // pred_fallthru
          _
        // Predicated region
        $region17: #{tpu_custom_call.1} parent=11 // pred_check
          %p624 = pneg %p134
        $region18: #{tpu_custom_call.1} parent=11 // pred_check_branch
          %626 = sbr.rel (%p624) target = $region20
        $region19: #{tpu_custom_call.1} parent=11 // pred_region
          _
        $region20: #{tpu_custom_call.1} parent=11 // pred_fallthru
          _
        // Predicated region
        $region21: #{tpu_custom_call.1} parent=11 // pred_check
          %p627 = pneg %p155
        $region22: #{tpu_custom_call.1} parent=11 // pred_check_branch
          %629 = sbr.rel (%p627) target = $region24
        $region23: #{tpu_custom_call.1} parent=11 // pred_region
          _
        $region24: #{tpu_custom_call.1} parent=11 // pred_fallthru
          _
        // Predicated region
        $region25: #{tpu_custom_call.1} parent=11 // pred_check
          %p630 = pneg %p176
        $region26: #{tpu_custom_call.1} parent=11 // pred_check_branch
          %632 = sbr.rel (%p630) target = $region28
        $region27: #{tpu_custom_call.1} parent=11 // pred_region
          _
        $region28: #{tpu_custom_call.1} parent=11 // pred_fallthru
          _
        // Predicated region
        $region29: #{tpu_custom_call.1} parent=11 // pred_check
          %p633 = pneg %p197
        $region30: #{tpu_custom_call.1} parent=11 // pred_check_branch
          %635 = sbr.rel (%p633) target = $region32
        $region31: #{tpu_custom_call.1} parent=11 // pred_region
          _
        $region32: #{tpu_custom_call.1} parent=11 // pred_fallthru
          _
        // Predicated region
        $region33: #{tpu_custom_call.1} parent=11 // pred_check
          %p636 = pneg %p218
        $region34: #{tpu_custom_call.1} parent=11 // pred_check_branch
          %638 = sbr.rel (%p636) target = $region36
        $region35: #{tpu_custom_call.1} parent=11 // pred_region
          _
        $region36: #{tpu_custom_call.1} parent=11 // pred_fallthru
          _
        // Predicated region
        $region37: #{tpu_custom_call.1} parent=11 // pred_check
          %p639 = pneg %p239
        $region38: #{tpu_custom_call.1} parent=11 // pred_check_branch
          %641 = sbr.rel (%p639) target = $region40
        $region39: #{tpu_custom_call.1} parent=11 // pred_region
          _
        $region40: #{tpu_custom_call.1} parent=11 // pred_fallthru
          _
        // Predicated region
        $region41: #{tpu_custom_call.1} parent=11 // pred_check
          %p642 = pneg %p260
        $region42: #{tpu_custom_call.1} parent=11 // pred_check_branch
          %644 = sbr.rel (%p642) target = $region44
        $region43: #{tpu_custom_call.1} parent=11 // pred_region
          _
        $region44: #{tpu_custom_call.1} parent=11 // pred_fallthru
          _
        // Predicated region
        $region45: #{tpu_custom_call.1} parent=11 // pred_check
          %p645 = pneg %p281
        $region46: #{tpu_custom_call.1} parent=11 // pred_check_branch
          %647 = sbr.rel (%p645) target = $region48
        $region47: #{tpu_custom_call.1} parent=11 // pred_region
          _
        $region48: #{tpu_custom_call.1} parent=11 // pred_fallthru
          _
        // Predicated region
        $region49: #{tpu_custom_call.1} parent=11 // pred_check
          %p648 = pneg %p302
        $region50: #{tpu_custom_call.1} parent=11 // pred_check_branch
          %650 = sbr.rel (%p648) target = $region52
        $region51: #{tpu_custom_call.1} parent=11 // pred_region
          _
        $region52: #{tpu_custom_call.1} parent=11 // pred_fallthru
          _
        // Predicated region
        $region53: #{tpu_custom_call.1} parent=11 // pred_check
          %p651 = pneg %p323
        $region54: #{tpu_custom_call.1} parent=11 // pred_check_branch
          %653 = sbr.rel (%p651) target = $region56
        $region55: #{tpu_custom_call.1} parent=11 // pred_region
          %655 = vsyncadd [#allocation3], 0
          %s656 = sshll.u32 %s12, 4
          %s657 = int_to_ptr.hbm [resolvable:$true] %s656
          %s658 = sshll.u32 [#allocation2], 4
          %s659 = int_to_ptr.vmem [resolvable:$true] %s658
          %664 = dma.hbm_to_vmem [thread:$0]  %s657, 1536, %s659, [#allocation3], 128, 128, 8
        $region56: #{tpu_custom_call.1} parent=11 // pred_fallthru
          _
        // Predicated region
        $region57: #{tpu_custom_call.1} parent=11 // pred_check
          %p665 = pneg %p344
        $region58: #{tpu_custom_call.1} parent=11 // pred_check_branch
          %667 = sbr.rel (%p665) target = $region60
        $region59: #{tpu_custom_call.1} parent=11 // pred_region
          _
        $region60: #{tpu_custom_call.1} parent=11 // pred_fallthru
          _
        // Predicated region
        $region61: #{tpu_custom_call.1} parent=11 // pred_check
          %p668 = pneg %p365
        $region62: #{tpu_custom_call.1} parent=11 // pred_check_branch
          %670 = sbr.rel (%p668) target = $region64
        $region63: #{tpu_custom_call.1} parent=11 // pred_region
          _
        $region64: #{tpu_custom_call.1} parent=11 // pred_fallthru
          _
        // Predicated region
        $region65: #{tpu_custom_call.1} parent=11 // pred_check
          %p671 = pneg %p386
        $region66: #{tpu_custom_call.1} parent=11 // pred_check_branch
          %673 = sbr.rel (%p671) target = $region68
        $region67: #{tpu_custom_call.1} parent=11 // pred_region
          _
        $region68: #{tpu_custom_call.1} parent=11 // pred_fallthru
          _
        // Predicated region
        $region69: #{tpu_custom_call.1} parent=11 // pred_check
          %p674 = pneg %p407
        $region70: #{tpu_custom_call.1} parent=11 // pred_check_branch
          %676 = sbr.rel (%p674) target = $region72
        $region71: #{tpu_custom_call.1} parent=11 // pred_region
          %678 = vsyncadd [#allocation6], 0
          %s679 = sshll.u32 %s16, 4
          %s680 = int_to_ptr.hbm [resolvable:$true] %s679
          %s681 = sshll.u32 [#allocation5], 4
          %s682 = int_to_ptr.vmem [resolvable:$true] %s681
          %687 = dma.hbm_to_vmem [thread:$0]  %s680, 1536, %s682, [#allocation6], 128, 128, 8
        $region72: #{tpu_custom_call.1} parent=11 // pred_fallthru
          _
        // Predicated region
        $region73: #{tpu_custom_call.1} parent=11 // pred_check
          %p688 = pneg %p428
        $region74: #{tpu_custom_call.1} parent=11 // pred_check_branch
          %690 = sbr.rel (%p688) target = $region76
        $region75: #{tpu_custom_call.1} parent=11 // pred_region
          _
        $region76: #{tpu_custom_call.1} parent=11 // pred_fallthru
          _
        // Predicated region
        $region77: #{tpu_custom_call.1} parent=11 // pred_check
          %p691 = pneg %p449
        $region78: #{tpu_custom_call.1} parent=11 // pred_check_branch
          %693 = sbr.rel (%p691) target = $region80
        $region79: #{tpu_custom_call.1} parent=11 // pred_region
          _
        $region80: #{tpu_custom_call.1} parent=11 // pred_fallthru
          _
        // Predicated region
        $region81: #{tpu_custom_call.1} parent=11 // pred_check
          %p694 = pneg %p470
        $region82: #{tpu_custom_call.1} parent=11 // pred_check_branch
          %696 = sbr.rel (%p694) target = $region84
        $region83: #{tpu_custom_call.1} parent=11 // pred_region
          _
        $region84: #{tpu_custom_call.1} parent=11 // pred_fallthru
          _
        // Predicated region
        $region85: #{tpu_custom_call.1} parent=11 // pred_check
          %p697 = pneg %p491
        $region86: #{tpu_custom_call.1} parent=11 // pred_check_branch
          %699 = sbr.rel (%p697) target = $region88
        $region87: #{tpu_custom_call.1} parent=11 // pred_region
          _
        $region88: #{tpu_custom_call.1} parent=11 // pred_fallthru
          _
        // Predicated region
        $region89: #{tpu_custom_call.1} parent=11 // pred_check
          %p700 = pneg %p512
        $region90: #{tpu_custom_call.1} parent=11 // pred_check_branch
          %702 = sbr.rel (%p700) target = $region92
        $region91: #{tpu_custom_call.1} parent=11 // pred_region
          _
        $region92: #{tpu_custom_call.1} parent=11 // pred_fallthru
          _
        // Predicated region
        $region93: #{tpu_custom_call.1} parent=11 // pred_check
          %p703 = pneg %p533
        $region94: #{tpu_custom_call.1} parent=11 // pred_check_branch
          %705 = sbr.rel (%p703) target = $region96
        $region95: #{tpu_custom_call.1} parent=11 // pred_region
          _
        $region96: #{tpu_custom_call.1} parent=11 // pred_fallthru
          _
        // Predicated region
        $region97: #{tpu_custom_call.1} parent=11 // pred_check
          %p706 = pneg %p554
        $region98: #{tpu_custom_call.1} parent=11 // pred_check_branch
          %708 = sbr.rel (%p706) target = $region100
        $region99: #{tpu_custom_call.1} parent=11 // pred_region
          _
        $region100: #{tpu_custom_call.1} parent=11 // pred_fallthru
          _
      $region12: #{tpu_custom_call.1} parent=5 // pred_fallthru
        _
      %p709 = scmp.lt.s32.totalorder %s40, 2
      // Predicated region
      $region101: #{tpu_custom_call.1} parent=5 // pred_check
        %p710 = pneg %p709
      $region102: #{tpu_custom_call.1} parent=5 // pred_check_branch
        %712 = sbr.rel (%p710) target = $region104
      $region103: #{tpu_custom_call.1} parent=5 // pred_region
        // Predicated region
        $region105: #{tpu_custom_call.1} parent=103 // pred_check
          %p713 = pneg %p60
        $region106: #{tpu_custom_call.1} parent=103 // pred_check_branch
          %715 = sbr.rel (%p713) target = $region108
        $region107: #{tpu_custom_call.1} parent=103 // pred_region
          %p716 = scmp.lt.s32.totalorder %s40, 1
          %s717 = scalar_select %p716, %s40, 1
          %s718 = smul.addr %s717, 8
          %s719 = scalar_lea.vmem %s0, %s718
        $region108: #{tpu_custom_call.1} parent=103 // pred_fallthru
          _
        // Predicated region
        $region109: #{tpu_custom_call.1} parent=103 // pred_check
          %p720 = pneg %p86
        $region110: #{tpu_custom_call.1} parent=103 // pred_check_branch
          %722 = sbr.rel (%p720) target = $region112
        $region111: #{tpu_custom_call.1} parent=103 // pred_region
          %p723 = scmp.lt.s32.totalorder %s40, 1
          %s724 = scalar_select %p723, %s40, 1
          %s725 = scalar_lea.vmem %s1, %s724
        $region112: #{tpu_custom_call.1} parent=103 // pred_fallthru
          _
      $region104: #{tpu_custom_call.1} parent=5 // pred_fallthru
        _
      %p726 = scmp.le.s32.totalorder 1, %s40
      %p727 = scmp.lt.s32.totalorder %s40, 3
      %p728 = pnand %p726, %p727
      %p729 = pneg %p728
      // Predicated region
      $region113: #{tpu_custom_call.1} parent=5 // pred_check
        _
      $region114: #{tpu_custom_call.1} parent=5 // pred_check_branch
        %731 = sbr.rel (%p728) target = $region116
      $region115: #{tpu_custom_call.1} parent=5 // pred_region
        %s732 = ssub.s32 %s40, 1
        // Predicated region
        $region117: #{tpu_custom_call.1} parent=115 // pred_check
          %p733 = pneg %p323
        $region118: #{tpu_custom_call.1} parent=115 // pred_check_branch
          %735 = sbr.rel (%p733) target = $region120
        $region119: #{tpu_custom_call.1} parent=115 // pred_region
          %737 = dma.done [#allocation3], 1536
        $region120: #{tpu_custom_call.1} parent=115 // pred_fallthru
          _
        // Predicated region
        $region121: #{tpu_custom_call.1} parent=115 // pred_check
          %p738 = pneg %p407
        $region122: #{tpu_custom_call.1} parent=115 // pred_check_branch
          %740 = sbr.rel (%p738) target = $region124
        $region123: #{tpu_custom_call.1} parent=115 // pred_region
          %742 = dma.done [#allocation6], 1536
        $region124: #{tpu_custom_call.1} parent=115 // pred_fallthru
          _
        %p743 = scmp.lt.s32.totalorder %s45, 1
        %s744 = scalar_select %p743, %s45, 1
        %s745 = smul.addr %s744, 8
        %s746 = scalar_lea.vmem %s0, %s745
        %p747 = pneg %p66
        %p748 = pneg %p63
        %p749 = scmp.lt.s32.totalorder %s45, 1
        %s750 = scalar_select %p749, %s45, 1
        %s751 = scalar_lea.vmem %s1, %s750
        %p752 = pneg %p92
        %p753 = pneg %p89
        %p754 = pneg %p113
        %p755 = pneg %p110
        %p756 = pneg %p134
        %p757 = pneg %p131
        %p758 = pneg %p155
        %p759 = pneg %p152
        %p760 = pneg %p176
        %p761 = pneg %p173
        %p762 = pneg %p197
        %p763 = pneg %p194
        %p764 = pneg %p218
        %p765 = pneg %p215
        %p766 = pneg %p239
        %p767 = pneg %p236
        %p768 = pneg %p260
        %p769 = pneg %p257
        %p770 = pneg %p281
        %p771 = pneg %p278
        %p772 = pneg %p302
        %p773 = pneg %p299
        %p774 = pneg %p323
        %p775 = pneg %p320
        %p776 = pneg %p344
        %p777 = pneg %p341
        %p778 = pneg %p365
        %p779 = pneg %p362
        %p780 = pneg %p386
        %p781 = pneg %p383
        %p782 = pneg %p407
        %p783 = pneg %p404
        %p784 = pneg %p428
        %p785 = pneg %p425
        %p786 = pneg %p449
        %p787 = pneg %p446
        %p788 = pneg %p470
        %p789 = pneg %p467
        %p790 = pneg %p491
        %p791 = pneg %p488
        %p792 = pneg %p512
        %p793 = pneg %p509
        %p794 = pneg %p533
        %p795 = pneg %p530
        %p796 = pneg %p554
        %p797 = pneg %p551
        %p798 = pneg %p580
        %p799 = pneg %p577
        %s800 = sand.u32 %s567, 1
        %s801 = scalar_lea.sflag [#allocation4], %s800
        %s802 = sand.u32 %s567, 1
        %s803 = smul.addr %s802, 8
        %s804 = scalar_lea.vmem [#allocation7], %s803
        %p805 = pneg %p606
        %p806 = pneg %p603
        %s807 = sand.u32 %s593, 1
        %s808 = scalar_lea.sflag [#allocation9], %s807
        %s809 = sand.u32 %s593, 1
        %s810 = scalar_lea.vmem [#allocation8], %s809
        %p811 = scmp.lt.s32.totalorder %s45, 1
        %s812 = scalar_select %p811, %s45, 1
        %s813 = smul.addr %s812, 8
        %s814 = scalar_lea.vmem %s0, %s813
        %p815 = scmp.lt.s32.totalorder %s45, 1
        %s816 = scalar_select %p815, %s45, 1
        %s817 = scalar_lea.vmem %s1, %s816
        %v818 = vld [vmem:[%s814] sm:$0xff]
        %v819 = vlaneseq
        %v820 = vand.u32 %v819, 127
        %821 = vset.pattern.permute.xlu0 0
        %822 = vperm.xlu0 %821, %v818
        %v823 = vpop.permute.xlu0 %822
        %vm824 = vcmp.eq.s32.totalorder %v823, %v820
        %v825 = vsel %vm824, 1, 0
        %v826 = vcvt.s32.f32 %v825
        %v827 = vld [vmem:[%s3] sm:$0xff]
        %v828 = vld [vmem:[%s2] sm:$0xff]
        %v829 = vld [vmem:[%s2 + $0x8] sm:$0xff]
        %v830 = vld [vmem:[%s2 + $0x10] sm:$0xff]
        %v831 = vld [vmem:[%s2 + $0x18] sm:$0xff]
        %v832 = vld [vmem:[%s2 + $0x20] sm:$0xff]
        %v833 = vld [vmem:[%s2 + $0x28] sm:$0xff]
        %v834 = vld [vmem:[%s2 + $0x30] sm:$0xff]
        %vm835 = vcmask 457728
        %v837 = vsel %vm835, %v826, 0
        %839 = vmatpush.msra.mxu0 0.0
        %840 = vmatpush.msra.mxu0 0.0
        %841 = vmatpush.msra.mxu0 0.0
        %842 = vmatpush.msra.mxu0 0.0
        %843 = vmatpush.msra.mxu0 0.0
        %844 = vmatpush.msra.mxu0 0.0
        %845 = vmatpush.msra.mxu0 0.0
        %846 = vmatpush.msra.mxu0 0.0
        %847 = vmatpush.msra.mxu0 0.0
        %848 = vmatpush.msra.mxu0 %v834
        %849 = vmatpush.msra.mxu0 %v833
        %850 = vmatpush.msra.mxu0 %v832
        %851 = vmatpush.msra.mxu0 %v831
        %852 = vmatpush.msra.mxu0 %v830
        %853 = vmatpush.msra.mxu0 %v829
        %854 = vmatpush.msra.mxu0 %v828
        %855 = vmatmul.f32.gmra.mxu0 %v837
        %v856 = vpop.f32.mrf.mxu0
        %v857 = vadd.f32 %v827, %v856
        %858 = vdwg.mxu0
        %v859 = vld [vmem:[%s817] sm:$0x1]
        %vm860 = vcmp.ne.s32.totalorder %v859, 0
        %vm861 = vcmp.lt.s32.totalorder %v820, 0
        %v862 = vsub.s32 0, %v820
        %v863 = vsel %vm861, %v862, %v820
        %v864 = vshrl.u32 %v863, 3
        %v865 = vand.u32 %v863, 7
        %v866 = vsub.s32 0, %v865
        %v867 = vsel %vm861, %v866, %v865
        %vm868 = vcmp.ne.s32.totalorder %v867, 0
        %vm869 = vcmp.lt.s32.totalorder %v867, 0
        %vm870 = vmand %vm869, %vm868
        %v871 = vadd.s32 %v867, 8
        %v872 = vsel %vm870, %v871, %v867
        %vm873 = vcmp.eq.s32.totalorder %v872, 0
        %vm874 = vmor %vm860, %vm873
        %v875 = vsel %vm874, 0.0, -1e+09
        %v876 = vld [vmem:[%s4] sm:$0x1]
        %v877 = vld [vmem:[%s5] sm:$0x1]
        %vm878 = vcmask 392192
        %v879 = vsel %vm878, %v857, 0.0
        %880 = vadd.xlane.f32.xlu0 %v879
        %v881 = vpop.xlane.xlu0 %880
        %v882 = vrcp.pop 48.0
        %v883 = vmul.f32 48.0, %v882
        %v884 = vsub.f32 1.0, %v883
        %v885 = vmul.f32 %v882, %v884
        %v886 = vadd.f32 %v882, %v885
        %vm887 = vweird.f32 %v882
        %v888 = vsel %vm887, %v882, %v886
        %v889 = vmul.f32 %v881, %v888
        %v890 = vsub.f32 %v857, %v889
        %v891 = vmul.f32 %v890, %v890
        %v892 = vsel %vm878, %v891, 0.0
        %893 = vadd.xlane.f32.xlu0 %v892
        %v894 = vpop.xlane.xlu0 %893
        %v895 = vmul.f32 %v894, 0.021276595
        %v897 = vperm.slane %v876, 0
        %v899 = vmul.f32 %v897, %v890
        %v900 = vadd.f32 %v895, 1e-06
        %v901 = vrsqrt.pop %v900
        %v902 = vmul.f32 %v901, %v900
        %v903 = vmul.f32 %v902, %v901
        %v904 = vmul.f32 0.5, %v903
        %v905 = vsub.f32 1.5, %v904
        %v906 = vmul.f32 %v901, %v905
        %vm907 = vweird.f32 %v900
        %vm908 = vweird.f32 %v901
        %vm909 = vmor %vm907, %vm908
        %v910 = vsel %vm909, %v901, %v906
        %v911 = vmul.f32 %v899, %v910
        %v913 = vperm.slane %v877, 0
        %v915 = vadd.f32 %v911, %v913
        %v916 = vld [vmem:[%s6] sm:$0xff]
        %v917 = vld [vmem:[%s6 + $0x8] sm:$0xff]
        %v918 = vld [vmem:[%s6 + $0x10] sm:$0xff]
        %v919 = vld [vmem:[%s6 + $0x18] sm:$0xff]
        %v920 = vld [vmem:[%s6 + $0x20] sm:$0xff]
        %v921 = vld [vmem:[%s6 + $0x28] sm:$0xff]
        %v922 = vld [vmem:[%s7] sm:$0x1]
        %v924 = vperm.slane %v922, 0
        %v927 = vsel %vm878, %v915, 0
        %929 = vmatpush.msra.mxu0 0.0
        %930 = vmatpush.msra.mxu0 0.0
        %931 = vmatpush.msra.mxu0 0.0
        %932 = vmatpush.msra.mxu0 0.0
        %933 = vmatpush.msra.mxu0 0.0
        %934 = vmatpush.msra.mxu0 0.0
        %935 = vmatpush.msra.mxu0 0.0
        %936 = vmatpush.msra.mxu0 0.0
        %937 = vmatpush.msra.mxu0 0.0
        %938 = vmatpush.msra.mxu0 0.0
        %939 = vmatpush.msra.mxu0 %v921
        %940 = vmatpush.msra.mxu0 %v920
        %941 = vmatpush.msra.mxu0 %v919
        %942 = vmatpush.msra.mxu0 %v918
        %943 = vmatpush.msra.mxu0 %v917
        %944 = vmatpush.msra.mxu0 %v916
        %945 = vmatmul.f32.gmra.mxu0 %v927
        %v946 = vpop.f32.mrf.mxu0
        %v947 = vadd.f32 %v924, %v946
        %948 = vdwg.mxu0
        %v949 = vld [vmem:[%s8] sm:$0xff]
        %v950 = vld [vmem:[%s8 + $0x8] sm:$0xff]
        %v951 = vld [vmem:[%s8 + $0x10] sm:$0xff]
        %v952 = vld [vmem:[%s8 + $0x18] sm:$0xff]
        %v953 = vld [vmem:[%s8 + $0x20] sm:$0xff]
        %v954 = vld [vmem:[%s8 + $0x28] sm:$0xff]
        %v955 = vld [vmem:[%s9] sm:$0x1]
        %v957 = vperm.slane %v955, 0
        %959 = vmatpush.msra.mxu0 0.0
        %960 = vmatpush.msra.mxu0 0.0
        %961 = vmatpush.msra.mxu0 0.0
        %962 = vmatpush.msra.mxu0 0.0
        %963 = vmatpush.msra.mxu0 0.0
        %964 = vmatpush.msra.mxu0 0.0
        %965 = vmatpush.msra.mxu0 0.0
        %966 = vmatpush.msra.mxu0 0.0
        %967 = vmatpush.msra.mxu0 0.0
        %968 = vmatpush.msra.mxu0 0.0
        %969 = vmatpush.msra.mxu0 %v954
        %970 = vmatpush.msra.mxu0 %v953
        %971 = vmatpush.msra.mxu0 %v952
        %972 = vmatpush.msra.mxu0 %v951
        %973 = vmatpush.msra.mxu0 %v950
        %974 = vmatpush.msra.mxu0 %v949
        %975 = vmatmul.f32.gmra.mxu0 %v927
        %v976 = vpop.f32.mrf.mxu0
        %v977 = vadd.f32 %v957, %v976
        %978 = vdwg.mxu0
        %v979 = vld [vmem:[%s10] sm:$0xff]
        %v980 = vld [vmem:[%s10 + $0x8] sm:$0xff]
        %v981 = vld [vmem:[%s10 + $0x10] sm:$0xff]
        %v982 = vld [vmem:[%s10 + $0x18] sm:$0xff]
        %v983 = vld [vmem:[%s10 + $0x20] sm:$0xff]
        %v984 = vld [vmem:[%s10 + $0x28] sm:$0xff]
        %v985 = vld [vmem:[%s11] sm:$0x1]
        %v987 = vperm.slane %v985, 0
        %989 = vmatpush.msra.mxu0 0.0
        %990 = vmatpush.msra.mxu0 0.0
        %991 = vmatpush.msra.mxu0 0.0
        %992 = vmatpush.msra.mxu0 0.0
        %993 = vmatpush.msra.mxu0 0.0
        %994 = vmatpush.msra.mxu0 0.0
        %995 = vmatpush.msra.mxu0 0.0
        %996 = vmatpush.msra.mxu0 0.0
        %997 = vmatpush.msra.mxu0 0.0
        %998 = vmatpush.msra.mxu0 0.0
        %999 = vmatpush.msra.mxu0 %v984
        %1000 = vmatpush.msra.mxu0 %v983
        %1001 = vmatpush.msra.mxu0 %v982
        %1002 = vmatpush.msra.mxu0 %v981
        %1003 = vmatpush.msra.mxu0 %v980
        %1004 = vmatpush.msra.mxu0 %v979
        %1005 = vmatmul.f32.gmra.mxu0 %v927
        %v1006 = vpop.f32.mrf.mxu0
        %v1007 = vadd.f32 %v987, %v1006
        %1008 = vdwg.mxu0
        %v1010 = vperm.slane %v875, 0
        %vm1012 = vcmask 130048
        %v1014 = vsel %vm1012, %v947, 0
        %v1017 = vsel %vm1012, %v977, 0
        %1019 = vmatpush.xpose.msra.mxu0 0.0
        %1020 = vmatpush.xpose.msra.mxu0 0.0
        %1021 = vmatpush.xpose.msra.mxu0 0.0
        %1022 = vmatpush.xpose.msra.mxu0 0.0
        %1023 = vmatpush.xpose.msra.mxu0 0.0
        %1024 = vmatpush.xpose.msra.mxu0 0.0
        %1025 = vmatpush.xpose.msra.mxu0 0.0
        %1026 = vmatpush.xpose.msra.mxu0 0.0
        %1027 = vmatpush.xpose.msra.mxu0 0.0
        %1028 = vmatpush.xpose.msra.mxu0 0.0
        %1029 = vmatpush.xpose.msra.mxu0 0.0
        %1030 = vmatpush.xpose.msra.mxu0 0.0
        %1031 = vmatpush.xpose.msra.mxu0 0.0
        %1032 = vmatpush.xpose.msra.mxu0 0.0
        %1033 = vmatpush.xpose.msra.mxu0 0.0
        %1034 = vmatpush.xpose.msra.mxu0 %v1017
        %1035 = vmatmul.f32.gmra.mxu0 %v1014
        %v1036 = vpop.f32.mrf.mxu0
        %v1037 = vadd.f32 %v1010, %v1036
        %1038 = vdwg.mxu0
        %vm1039 = vcmask 64512
        %v1040 = vsel %vm1039, %v1037, -inf
        %1041 = vmax.xlane.f32.xlu0 %v1040
        %v1042 = vpop.xlane.xlu0 %1041
        %v1043 = vsub.f32 %v1037, %v1042
        %v1044 = vmul.f32 %v1043, 1.442695
        %v1045 = vpow.pop %v1044
        %v1046 = vsel %vm1039, %v1045, 0.0
        %1047 = vadd.xlane.f32.xlu0 %v1046
        %v1048 = vpop.xlane.xlu0 %1047
        %v1049 = vrcp.pop %v1048
        %v1050 = vmul.f32 %v1045, %v1049
        %v1052 = vsel %vm1039, %v1050, 0
        %1054 = vmatpush.msra.mxu0 0.0
        %1055 = vmatpush.msra.mxu0 0.0
        %1056 = vmatpush.msra.mxu0 0.0
        %1057 = vmatpush.msra.mxu0 0.0
        %1058 = vmatpush.msra.mxu0 0.0
        %1059 = vmatpush.msra.mxu0 0.0
        %1060 = vmatpush.msra.mxu0 0.0
        %1061 = vmatpush.msra.mxu0 0.0
        %1062 = vmatpush.msra.mxu0 0.0
        %1063 = vmatpush.msra.mxu0 0.0
        %1064 = vmatpush.msra.mxu0 0.0
        %1065 = vmatpush.msra.mxu0 0.0
        %1066 = vmatpush.msra.mxu0 0.0
        %1067 = vmatpush.msra.mxu0 0.0
        %1068 = vmatpush.msra.mxu0 0.0
        %1069 = vmatpush.msra.mxu0 %v1007
        %1070 = vmatmul.f32.gmra.mxu0 %v1052
        %v1071 = vpop.f32.mrf.mxu0
        %v1072 = vadd.f32 0.0, %v1071
        %1073 = vdwg.mxu0
        %1074 = vrot.lane.b32.xlu0 %v947, 112
        %v1075 = vpop.permute.xlu0 %1074
        %1076 = vrot.lane.b32.xlu0 %v977, 112
        %v1077 = vpop.permute.xlu0 %1076
        %v1078 = vsel %vm1012, %v1075, 0
        %v1080 = vsel %vm1012, %v1077, 0
        %1082 = vmatpush.xpose.msra.mxu0 0.0
        %1083 = vmatpush.xpose.msra.mxu0 0.0
        %1084 = vmatpush.xpose.msra.mxu0 0.0
        %1085 = vmatpush.xpose.msra.mxu0 0.0
        %1086 = vmatpush.xpose.msra.mxu0 0.0
        %1087 = vmatpush.xpose.msra.mxu0 0.0
        %1088 = vmatpush.xpose.msra.mxu0 0.0
        %1089 = vmatpush.xpose.msra.mxu0 0.0
        %1090 = vmatpush.xpose.msra.mxu0 0.0
        %1091 = vmatpush.xpose.msra.mxu0 0.0
        %1092 = vmatpush.xpose.msra.mxu0 0.0
        %1093 = vmatpush.xpose.msra.mxu0 0.0
        %1094 = vmatpush.xpose.msra.mxu0 0.0
        %1095 = vmatpush.xpose.msra.mxu0 0.0
        %1096 = vmatpush.xpose.msra.mxu0 0.0
        %1097 = vmatpush.xpose.msra.mxu0 %v1080
        %1098 = vmatmul.f32.gmra.mxu0 %v1078
        %v1099 = vpop.f32.mrf.mxu0
        %v1100 = vadd.f32 %v1010, %v1099
        %1101 = vdwg.mxu0
        %v1102 = vsel %vm1039, %v1100, -inf
        %1103 = vmax.xlane.f32.xlu0 %v1102
        %v1104 = vpop.xlane.xlu0 %1103
        %v1105 = vsub.f32 %v1100, %v1104
        %v1106 = vmul.f32 %v1105, 1.442695
        %v1107 = vpow.pop %v1106
        %v1108 = vsel %vm1039, %v1107, 0.0
        %1109 = vadd.xlane.f32.xlu0 %v1108
        %v1110 = vpop.xlane.xlu0 %1109
        %v1111 = vrcp.pop %v1110
        %v1112 = vmul.f32 %v1107, %v1111
        %1114 = vrot.lane.b32.xlu0 %v1007, 112
        %v1115 = vpop.permute.xlu0 %1114
        %v1118 = vsel %vm1039, %v1112, 0
        %1120 = vmatpush.msra.mxu0 0.0
        %1121 = vmatpush.msra.mxu0 0.0
        %1122 = vmatpush.msra.mxu0 0.0
        %1123 = vmatpush.msra.mxu0 0.0
        %1124 = vmatpush.msra.mxu0 0.0
        %1125 = vmatpush.msra.mxu0 0.0
        %1126 = vmatpush.msra.mxu0 0.0
        %1127 = vmatpush.msra.mxu0 0.0
        %1128 = vmatpush.msra.mxu0 0.0
        %1129 = vmatpush.msra.mxu0 0.0
        %1130 = vmatpush.msra.mxu0 0.0
        %1131 = vmatpush.msra.mxu0 0.0
        %1132 = vmatpush.msra.mxu0 0.0
        %1133 = vmatpush.msra.mxu0 0.0
        %1134 = vmatpush.msra.mxu0 0.0
        %1135 = vmatpush.msra.mxu0 %v1115
        %1136 = vmatmul.f32.gmra.mxu0 %v1118
        %v1137 = vpop.f32.mrf.mxu0
        %v1138 = vadd.f32 0.0, %v1137
        %1139 = vdwg.mxu0
        %1140 = vrot.lane.b32.xlu0 %v947, 96
        %v1141 = vpop.permute.xlu0 %1140
        %1142 = vrot.lane.b32.xlu0 %v977, 96
        %v1143 = vpop.permute.xlu0 %1142
        %v1144 = vsel %vm1012, %v1141, 0
        %v1146 = vsel %vm1012, %v1143, 0
        %1148 = vmatpush.xpose.msra.mxu0 0.0
        %1149 = vmatpush.xpose.msra.mxu0 0.0
        %1150 = vmatpush.xpose.msra.mxu0 0.0
        %1151 = vmatpush.xpose.msra.mxu0 0.0
        %1152 = vmatpush.xpose.msra.mxu0 0.0
        %1153 = vmatpush.xpose.msra.mxu0 0.0
        %1154 = vmatpush.xpose.msra.mxu0 0.0
        %1155 = vmatpush.xpose.msra.mxu0 0.0
        %1156 = vmatpush.xpose.msra.mxu0 0.0
        %1157 = vmatpush.xpose.msra.mxu0 0.0
        %1158 = vmatpush.xpose.msra.mxu0 0.0
        %1159 = vmatpush.xpose.msra.mxu0 0.0
        %1160 = vmatpush.xpose.msra.mxu0 0.0
        %1161 = vmatpush.xpose.msra.mxu0 0.0
        %1162 = vmatpush.xpose.msra.mxu0 0.0
        %1163 = vmatpush.xpose.msra.mxu0 %v1146
        %1164 = vmatmul.f32.gmra.mxu0 %v1144
        %v1165 = vpop.f32.mrf.mxu0
        %v1166 = vadd.f32 %v1010, %v1165
        %1167 = vdwg.mxu0
        %v1168 = vsel %vm1039, %v1166, -inf
        %1169 = vmax.xlane.f32.xlu0 %v1168
        %v1170 = vpop.xlane.xlu0 %1169
        %v1171 = vsub.f32 %v1166, %v1170
        %v1172 = vmul.f32 %v1171, 1.442695
        %v1173 = vpow.pop %v1172
        %v1174 = vsel %vm1039, %v1173, 0.0
        %1175 = vadd.xlane.f32.xlu0 %v1174
        %v1176 = vpop.xlane.xlu0 %1175
        %v1177 = vrcp.pop %v1176
        %v1178 = vmul.f32 %v1173, %v1177
        %1179 = vrot.lane.b32.xlu0 %v1007, 96
        %v1180 = vpop.permute.xlu0 %1179
        %v1183 = vsel %vm1039, %v1178, 0
        %1185 = vmatpush.msra.mxu0 0.0
        %1186 = vmatpush.msra.mxu0 0.0
        %1187 = vmatpush.msra.mxu0 0.0
        %1188 = vmatpush.msra.mxu0 0.0
        %1189 = vmatpush.msra.mxu0 0.0
        %1190 = vmatpush.msra.mxu0 0.0
        %1191 = vmatpush.msra.mxu0 0.0
        %1192 = vmatpush.msra.mxu0 0.0
        %1193 = vmatpush.msra.mxu0 0.0
        %1194 = vmatpush.msra.mxu0 0.0
        %1195 = vmatpush.msra.mxu0 0.0
        %1196 = vmatpush.msra.mxu0 0.0
        %1197 = vmatpush.msra.mxu0 0.0
        %1198 = vmatpush.msra.mxu0 0.0
        %1199 = vmatpush.msra.mxu0 0.0
        %1200 = vmatpush.msra.mxu0 %v1180
        %1201 = vmatmul.f32.gmra.mxu0 %v1183
        %v1202 = vpop.f32.mrf.mxu0
        %v1203 = vadd.f32 0.0, %v1202
        %1204 = vdwg.mxu0
        %1206 = vrot.lane.b32.xlu0 %v1138, 16
        %v1207 = vpop.permute.xlu0 %1206
        %1210 = vrot.lane.b32.xlu0 %v1203, 32
        %v1211 = vpop.permute.xlu0 %1210
        %v1213 = vsel %vm1012, %v1072, %v1207
        %vm1214 = vcmask 261120
        %v1215 = vsel %vm1214, %v1213, %v1211
        %v1216 = vld [vmem:[#allocation2] sm:$0xff]
        %v1217 = vld [vmem:[#allocation2 + $0x8] sm:$0xff]
        %v1218 = vld [vmem:[#allocation2 + $0x10] sm:$0xff]
        %v1219 = vld [vmem:[#allocation2 + $0x18] sm:$0xff]
        %v1220 = vld [vmem:[#allocation2 + $0x20] sm:$0xff]
        %v1221 = vld [vmem:[#allocation2 + $0x28] sm:$0xff]
        %v1223 = vsel %vm878, %v1215, 0
        %1225 = vmatpush.msra.mxu0 0.0
        %1226 = vmatpush.msra.mxu0 0.0
        %1227 = vmatpush.msra.mxu0 0.0
        %1228 = vmatpush.msra.mxu0 0.0
        %1229 = vmatpush.msra.mxu0 0.0
        %1230 = vmatpush.msra.mxu0 0.0
        %1231 = vmatpush.msra.mxu0 0.0
        %1232 = vmatpush.msra.mxu0 0.0
        %1233 = vmatpush.msra.mxu0 0.0
        %1234 = vmatpush.msra.mxu0 0.0
        %1235 = vmatpush.msra.mxu0 %v1221
        %1236 = vmatpush.msra.mxu0 %v1220
        %1237 = vmatpush.msra.mxu0 %v1219
        %1238 = vmatpush.msra.mxu0 %v1218
        %1239 = vmatpush.msra.mxu0 %v1217
        %1240 = vmatpush.msra.mxu0 %v1216
        %1241 = vmatmul.f32.gmra.mxu0 %v1223
        %v1242 = vpop.f32.mrf.mxu0
        %v1243 = vadd.f32 0.0, %v1242
        %1244 = vdwg.mxu0
        %v1245 = vadd.f32 %v857, %v1243
        %v1246 = vld [vmem:[%s13] sm:$0x1]
        %v1248 = vperm.slane %v1246, 0
        %v1250 = vadd.f32 %v1245, %v1248
        %v1251 = vld [vmem:[%s14] sm:$0x1]
        %v1252 = vld [vmem:[%s15] sm:$0x1]
        %v1253 = vsel %vm878, %v1250, 0.0
        %1254 = vadd.xlane.f32.xlu0 %v1253
        %v1255 = vpop.xlane.xlu0 %1254
        %v1256 = vmul.f32 %v1255, %v888
        %v1257 = vsub.f32 %v1250, %v1256
        %v1258 = vmul.f32 %v1257, %v1257
        %v1259 = vsel %vm878, %v1258, 0.0
        %1260 = vadd.xlane.f32.xlu0 %v1259
        %v1261 = vpop.xlane.xlu0 %1260
        %v1262 = vmul.f32 %v1261, 0.021276595
        %v1264 = vperm.slane %v1251, 0
        %v1266 = vmul.f32 %v1264, %v1257
        %v1267 = vadd.f32 %v1262, 1e-06
        %v1268 = vrsqrt.pop %v1267
        %v1269 = vmul.f32 %v1268, %v1267
        %v1270 = vmul.f32 %v1269, %v1268
        %v1271 = vmul.f32 0.5, %v1270
        %v1272 = vsub.f32 1.5, %v1271
        %v1273 = vmul.f32 %v1268, %v1272
        %vm1274 = vweird.f32 %v1267
        %vm1275 = vweird.f32 %v1268
        %vm1276 = vmor %vm1274, %vm1275
        %v1277 = vsel %vm1276, %v1268, %v1273
        %v1278 = vmul.f32 %v1266, %v1277
        %v1280 = vperm.slane %v1252, 0
        %v1282 = vadd.f32 %v1278, %v1280
        %v1283 = vld [vmem:[#allocation5] sm:$0xff]
        %v1284 = vld [vmem:[#allocation5 + $0x8] sm:$0xff]
        %v1285 = vld [vmem:[#allocation5 + $0x10] sm:$0xff]
        %v1286 = vld [vmem:[#allocation5 + $0x18] sm:$0xff]
        %v1287 = vld [vmem:[#allocation5 + $0x20] sm:$0xff]
        %v1288 = vld [vmem:[#allocation5 + $0x28] sm:$0xff]
        %v1289 = vld [vmem:[%s17] sm:$0x1]
        %v1291 = vperm.slane %v1289, 0
        %v1294 = vsel %vm878, %v1282, 0
        %1296 = vmatpush.msra.mxu0 0.0
        %1297 = vmatpush.msra.mxu0 0.0
        %1298 = vmatpush.msra.mxu0 0.0
        %1299 = vmatpush.msra.mxu0 0.0
        %1300 = vmatpush.msra.mxu0 0.0
        %1301 = vmatpush.msra.mxu0 0.0
        %1302 = vmatpush.msra.mxu0 0.0
        %1303 = vmatpush.msra.mxu0 0.0
        %1304 = vmatpush.msra.mxu0 0.0
        %1305 = vmatpush.msra.mxu0 0.0
        %1306 = vmatpush.msra.mxu0 %v1288
        %1307 = vmatpush.msra.mxu0 %v1287
        %1308 = vmatpush.msra.mxu0 %v1286
        %1309 = vmatpush.msra.mxu0 %v1285
        %1310 = vmatpush.msra.mxu0 %v1284
        %1311 = vmatpush.msra.mxu0 %v1283
        %1312 = vmatmul.f32.gmra.mxu0 %v1294
        %v1313 = vpop.f32.mrf.mxu0
        %v1314 = vadd.f32 %v1291, %v1313
        %1315 = vdwg.mxu0
        %v1316 = vmax.f32 %v1314, 0.0
        %v1317 = vld [vmem:[%s18] sm:$0xff]
        %v1318 = vld [vmem:[%s18 + $0x8] sm:$0xff]
        %v1319 = vld [vmem:[%s18 + $0x10] sm:$0xff]
        %v1320 = vld [vmem:[%s18 + $0x18] sm:$0xff]
        %v1321 = vld [vmem:[%s18 + $0x20] sm:$0xff]
        %v1322 = vld [vmem:[%s18 + $0x28] sm:$0xff]
        %v1323 = vld [vmem:[%s18 + $0x30] sm:$0xff]
        %v1324 = vld [vmem:[%s18 + $0x38] sm:$0xff]
        %v1325 = vld [vmem:[%s18 + $0x40] sm:$0xff]
        %v1326 = vld [vmem:[%s18 + $0x48] sm:$0xff]
        %v1327 = vld [vmem:[%s18 + $0x50] sm:$0xff]
        %v1328 = vld [vmem:[%s18 + $0x58] sm:$0xff]
        %vm1329 = vcmask 785408
        %v1331 = vsel %vm1329, %v1316, 0
        %1333 = vmatpush.msra.mxu0 0.0
        %1334 = vmatpush.msra.mxu0 0.0
        %1335 = vmatpush.msra.mxu0 0.0
        %1336 = vmatpush.msra.mxu0 0.0
        %1337 = vmatpush.msra.mxu0 %v1328
        %1338 = vmatpush.msra.mxu0 %v1327
        %1339 = vmatpush.msra.mxu0 %v1326
        %1340 = vmatpush.msra.mxu0 %v1325
        %1341 = vmatpush.msra.mxu0 %v1324
        %1342 = vmatpush.msra.mxu0 %v1323
        %1343 = vmatpush.msra.mxu0 %v1322
        %1344 = vmatpush.msra.mxu0 %v1321
        %1345 = vmatpush.msra.mxu0 %v1320
        %1346 = vmatpush.msra.mxu0 %v1319
        %1347 = vmatpush.msra.mxu0 %v1318
        %1348 = vmatpush.msra.mxu0 %v1317
        %1349 = vmatmul.f32.gmra.mxu0 %v1331
        %v1350 = vpop.f32.mrf.mxu0
        %v1351 = vadd.f32 0.0, %v1350
        %1352 = vdwg.mxu0
        %v1353 = vadd.f32 %v1250, %v1351
        %v1354 = vld [vmem:[%s19] sm:$0x1]
        %v1356 = vperm.slane %v1354, 0
        %v1358 = vadd.f32 %v1353, %v1356
        %s1359 = scalar_lea.vmem %s4, 1
        %v1360 = vld [vmem:[%s1359] sm:$0x1]
        %s1361 = scalar_lea.vmem %s5, 1
        %v1362 = vld [vmem:[%s1361] sm:$0x1]
        %v1363 = vsel %vm878, %v1358, 0.0
        %1364 = vadd.xlane.f32.xlu0 %v1363
        %v1365 = vpop.xlane.xlu0 %1364
        %v1366 = vmul.f32 %v1365, %v888
        %v1367 = vsub.f32 %v1358, %v1366
        %v1368 = vmul.f32 %v1367, %v1367
        %v1369 = vsel %vm878, %v1368, 0.0
        %1370 = vadd.xlane.f32.xlu0 %v1369
        %v1371 = vpop.xlane.xlu0 %1370
        %v1372 = vmul.f32 %v1371, 0.021276595
        %v1374 = vperm.slane %v1360, 0
        %v1376 = vmul.f32 %v1374, %v1367
        %v1377 = vadd.f32 %v1372, 1e-06
        %v1378 = vrsqrt.pop %v1377
        %v1379 = vmul.f32 %v1378, %v1377
        %v1380 = vmul.f32 %v1379, %v1378
        %v1381 = vmul.f32 0.5, %v1380
        %v1382 = vsub.f32 1.5, %v1381
        %v1383 = vmul.f32 %v1378, %v1382
        %vm1384 = vweird.f32 %v1377
        %vm1385 = vweird.f32 %v1378
        %vm1386 = vmor %vm1384, %vm1385
        %v1387 = vsel %vm1386, %v1378, %v1383
        %v1388 = vmul.f32 %v1376, %v1387
        %v1390 = vperm.slane %v1362, 0
        %v1392 = vadd.f32 %v1388, %v1390
        %s1393 = scalar_lea.vmem %s6, 48
        %v1394 = vld [vmem:[%s1393] sm:$0xff]
        %v1395 = vld [vmem:[%s1393 + $0x8] sm:$0xff]
        %v1396 = vld [vmem:[%s1393 + $0x10] sm:$0xff]
        %v1397 = vld [vmem:[%s1393 + $0x18] sm:$0xff]
        %v1398 = vld [vmem:[%s1393 + $0x20] sm:$0xff]
        %v1399 = vld [vmem:[%s1393 + $0x28] sm:$0xff]
        %s1400 = scalar_lea.vmem %s7, 1
        %v1401 = vld [vmem:[%s1400] sm:$0x1]
        %v1403 = vperm.slane %v1401, 0
        %v1406 = vsel %vm878, %v1392, 0
        %1408 = vmatpush.msra.mxu0 0.0
        %1409 = vmatpush.msra.mxu0 0.0
        %1410 = vmatpush.msra.mxu0 0.0
        %1411 = vmatpush.msra.mxu0 0.0
        %1412 = vmatpush.msra.mxu0 0.0
        %1413 = vmatpush.msra.mxu0 0.0
        %1414 = vmatpush.msra.mxu0 0.0
        %1415 = vmatpush.msra.mxu0 0.0
        %1416 = vmatpush.msra.mxu0 0.0
        %1417 = vmatpush.msra.mxu0 0.0
        %1418 = vmatpush.msra.mxu0 %v1399
        %1419 = vmatpush.msra.mxu0 %v1398
        %1420 = vmatpush.msra.mxu0 %v1397
        %1421 = vmatpush.msra.mxu0 %v1396
        %1422 = vmatpush.msra.mxu0 %v1395
        %1423 = vmatpush.msra.mxu0 %v1394
        %1424 = vmatmul.f32.gmra.mxu0 %v1406
        %v1425 = vpop.f32.mrf.mxu0
        %v1426 = vadd.f32 %v1403, %v1425
        %1427 = vdwg.mxu0
        %s1428 = scalar_lea.vmem %s8, 48
        %v1429 = vld [vmem:[%s1428] sm:$0xff]
        %v1430 = vld [vmem:[%s1428 + $0x8] sm:$0xff]
        %v1431 = vld [vmem:[%s1428 + $0x10] sm:$0xff]
        %v1432 = vld [vmem:[%s1428 + $0x18] sm:$0xff]
        %v1433 = vld [vmem:[%s1428 + $0x20] sm:$0xff]
        %v1434 = vld [vmem:[%s1428 + $0x28] sm:$0xff]
        %s1435 = scalar_lea.vmem %s9, 1
        %v1436 = vld [vmem:[%s1435] sm:$0x1]
        %v1438 = vperm.slane %v1436, 0
        %1440 = vmatpush.msra.mxu0 0.0
        %1441 = vmatpush.msra.mxu0 0.0
        %1442 = vmatpush.msra.mxu0 0.0
        %1443 = vmatpush.msra.mxu0 0.0
        %1444 = vmatpush.msra.mxu0 0.0
        %1445 = vmatpush.msra.mxu0 0.0
        %1446 = vmatpush.msra.mxu0 0.0
        %1447 = vmatpush.msra.mxu0 0.0
        %1448 = vmatpush.msra.mxu0 0.0
        %1449 = vmatpush.msra.mxu0 0.0
        %1450 = vmatpush.msra.mxu0 %v1434
        %1451 = vmatpush.msra.mxu0 %v1433
        %1452 = vmatpush.msra.mxu0 %v1432
        %1453 = vmatpush.msra.mxu0 %v1431
        %1454 = vmatpush.msra.mxu0 %v1430
        %1455 = vmatpush.msra.mxu0 %v1429
        %1456 = vmatmul.f32.gmra.mxu0 %v1406
        %v1457 = vpop.f32.mrf.mxu0
        %v1458 = vadd.f32 %v1438, %v1457
        %1459 = vdwg.mxu0
        %s1460 = scalar_lea.vmem %s10, 48
        %v1461 = vld [vmem:[%s1460] sm:$0xff]
        %v1462 = vld [vmem:[%s1460 + $0x8] sm:$0xff]
        %v1463 = vld [vmem:[%s1460 + $0x10] sm:$0xff]
        %v1464 = vld [vmem:[%s1460 + $0x18] sm:$0xff]
        %v1465 = vld [vmem:[%s1460 + $0x20] sm:$0xff]
        %v1466 = vld [vmem:[%s1460 + $0x28] sm:$0xff]
        %s1467 = scalar_lea.vmem %s11, 1
        %v1468 = vld [vmem:[%s1467] sm:$0x1]
        %v1470 = vperm.slane %v1468, 0
        %1472 = vmatpush.msra.mxu0 0.0
        %1473 = vmatpush.msra.mxu0 0.0
        %1474 = vmatpush.msra.mxu0 0.0
        %1475 = vmatpush.msra.mxu0 0.0
        %1476 = vmatpush.msra.mxu0 0.0
        %1477 = vmatpush.msra.mxu0 0.0
        %1478 = vmatpush.msra.mxu0 0.0
        %1479 = vmatpush.msra.mxu0 0.0
        %1480 = vmatpush.msra.mxu0 0.0
        %1481 = vmatpush.msra.mxu0 0.0
        %1482 = vmatpush.msra.mxu0 %v1466
        %1483 = vmatpush.msra.mxu0 %v1465
        %1484 = vmatpush.msra.mxu0 %v1464
        %1485 = vmatpush.msra.mxu0 %v1463
        %1486 = vmatpush.msra.mxu0 %v1462
        %1487 = vmatpush.msra.mxu0 %v1461
        %1488 = vmatmul.f32.gmra.mxu0 %v1406
        %v1489 = vpop.f32.mrf.mxu0
        %v1490 = vadd.f32 %v1470, %v1489
        %1491 = vdwg.mxu0
        %v1493 = vsel %vm1012, %v1426, 0
        %v1496 = vsel %vm1012, %v1458, 0
        %1498 = vmatpush.xpose.msra.mxu0 0.0
        %1499 = vmatpush.xpose.msra.mxu0 0.0
        %1500 = vmatpush.xpose.msra.mxu0 0.0
        %1501 = vmatpush.xpose.msra.mxu0 0.0
        %1502 = vmatpush.xpose.msra.mxu0 0.0
        %1503 = vmatpush.xpose.msra.mxu0 0.0
        %1504 = vmatpush.xpose.msra.mxu0 0.0
        %1505 = vmatpush.xpose.msra.mxu0 0.0
        %1506 = vmatpush.xpose.msra.mxu0 0.0
        %1507 = vmatpush.xpose.msra.mxu0 0.0
        %1508 = vmatpush.xpose.msra.mxu0 0.0
        %1509 = vmatpush.xpose.msra.mxu0 0.0
        %1510 = vmatpush.xpose.msra.mxu0 0.0
        %1511 = vmatpush.xpose.msra.mxu0 0.0
        %1512 = vmatpush.xpose.msra.mxu0 0.0
        %1513 = vmatpush.xpose.msra.mxu0 %v1496
        %1514 = vmatmul.f32.gmra.mxu0 %v1493
        %v1515 = vpop.f32.mrf.mxu0
        %v1516 = vadd.f32 %v1010, %v1515
        %1517 = vdwg.mxu0
        %v1518 = vsel %vm1039, %v1516, -inf
        %1519 = vmax.xlane.f32.xlu0 %v1518
        %v1520 = vpop.xlane.xlu0 %1519
        %v1521 = vsub.f32 %v1516, %v1520
        %v1522 = vmul.f32 %v1521, 1.442695
        %v1523 = vpow.pop %v1522
        %v1524 = vsel %vm1039, %v1523, 0.0
        %1525 = vadd.xlane.f32.xlu0 %v1524
        %v1526 = vpop.xlane.xlu0 %1525
        %v1527 = vrcp.pop %v1526
        %v1528 = vmul.f32 %v1523, %v1527
        %v1530 = vsel %vm1039, %v1528, 0
        %1532 = vmatpush.msra.mxu0 0.0
        %1533 = vmatpush.msra.mxu0 0.0
        %1534 = vmatpush.msra.mxu0 0.0
        %1535 = vmatpush.msra.mxu0 0.0
        %1536 = vmatpush.msra.mxu0 0.0
        %1537 = vmatpush.msra.mxu0 0.0
        %1538 = vmatpush.msra.mxu0 0.0
        %1539 = vmatpush.msra.mxu0 0.0
        %1540 = vmatpush.msra.mxu0 0.0
        %1541 = vmatpush.msra.mxu0 0.0
        %1542 = vmatpush.msra.mxu0 0.0
        %1543 = vmatpush.msra.mxu0 0.0
        %1544 = vmatpush.msra.mxu0 0.0
        %1545 = vmatpush.msra.mxu0 0.0
        %1546 = vmatpush.msra.mxu0 0.0
        %1547 = vmatpush.msra.mxu0 %v1490
        %1548 = vmatmul.f32.gmra.mxu0 %v1530
        %v1549 = vpop.f32.mrf.mxu0
        %v1550 = vadd.f32 0.0, %v1549
        %1551 = vdwg.mxu0
        %1552 = vrot.lane.b32.xlu0 %v1426, 112
        %v1553 = vpop.permute.xlu0 %1552
        %1554 = vrot.lane.b32.xlu0 %v1458, 112
        %v1555 = vpop.permute.xlu0 %1554
        %v1556 = vsel %vm1012, %v1553, 0
        %v1558 = vsel %vm1012, %v1555, 0
        %1560 = vmatpush.xpose.msra.mxu0 0.0
        %1561 = vmatpush.xpose.msra.mxu0 0.0
        %1562 = vmatpush.xpose.msra.mxu0 0.0
        %1563 = vmatpush.xpose.msra.mxu0 0.0
        %1564 = vmatpush.xpose.msra.mxu0 0.0
        %1565 = vmatpush.xpose.msra.mxu0 0.0
        %1566 = vmatpush.xpose.msra.mxu0 0.0
        %1567 = vmatpush.xpose.msra.mxu0 0.0
        %1568 = vmatpush.xpose.msra.mxu0 0.0
        %1569 = vmatpush.xpose.msra.mxu0 0.0
        %1570 = vmatpush.xpose.msra.mxu0 0.0
        %1571 = vmatpush.xpose.msra.mxu0 0.0
        %1572 = vmatpush.xpose.msra.mxu0 0.0
        %1573 = vmatpush.xpose.msra.mxu0 0.0
        %1574 = vmatpush.xpose.msra.mxu0 0.0
        %1575 = vmatpush.xpose.msra.mxu0 %v1558
        %1576 = vmatmul.f32.gmra.mxu0 %v1556
        %v1577 = vpop.f32.mrf.mxu0
        %v1578 = vadd.f32 %v1010, %v1577
        %1579 = vdwg.mxu0
        %v1580 = vsel %vm1039, %v1578, -inf
        %1581 = vmax.xlane.f32.xlu0 %v1580
        %v1582 = vpop.xlane.xlu0 %1581
        %v1583 = vsub.f32 %v1578, %v1582
        %v1584 = vmul.f32 %v1583, 1.442695
        %v1585 = vpow.pop %v1584
        %v1586 = vsel %vm1039, %v1585, 0.0
        %1587 = vadd.xlane.f32.xlu0 %v1586
        %v1588 = vpop.xlane.xlu0 %1587
        %v1589 = vrcp.pop %v1588
        %v1590 = vmul.f32 %v1585, %v1589
        %1592 = vrot.lane.b32.xlu0 %v1490, 112
        %v1593 = vpop.permute.xlu0 %1592
        %v1596 = vsel %vm1039, %v1590, 0
        %1598 = vmatpush.msra.mxu0 0.0
        %1599 = vmatpush.msra.mxu0 0.0
        %1600 = vmatpush.msra.mxu0 0.0
        %1601 = vmatpush.msra.mxu0 0.0
        %1602 = vmatpush.msra.mxu0 0.0
        %1603 = vmatpush.msra.mxu0 0.0
        %1604 = vmatpush.msra.mxu0 0.0
        %1605 = vmatpush.msra.mxu0 0.0
        %1606 = vmatpush.msra.mxu0 0.0
        %1607 = vmatpush.msra.mxu0 0.0
        %1608 = vmatpush.msra.mxu0 0.0
        %1609 = vmatpush.msra.mxu0 0.0
        %1610 = vmatpush.msra.mxu0 0.0
        %1611 = vmatpush.msra.mxu0 0.0
        %1612 = vmatpush.msra.mxu0 0.0
        %1613 = vmatpush.msra.mxu0 %v1593
        %1614 = vmatmul.f32.gmra.mxu0 %v1596
        %v1615 = vpop.f32.mrf.mxu0
        %v1616 = vadd.f32 0.0, %v1615
        %1617 = vdwg.mxu0
        %1618 = vrot.lane.b32.xlu0 %v1426, 96
        %v1619 = vpop.permute.xlu0 %1618
        %1620 = vrot.lane.b32.xlu0 %v1458, 96
        %v1621 = vpop.permute.xlu0 %1620
        %v1622 = vsel %vm1012, %v1619, 0
        %v1624 = vsel %vm1012, %v1621, 0
        %1626 = vmatpush.xpose.msra.mxu0 0.0
        %1627 = vmatpush.xpose.msra.mxu0 0.0
        %1628 = vmatpush.xpose.msra.mxu0 0.0
        %1629 = vmatpush.xpose.msra.mxu0 0.0
        %1630 = vmatpush.xpose.msra.mxu0 0.0
        %1631 = vmatpush.xpose.msra.mxu0 0.0
        %1632 = vmatpush.xpose.msra.mxu0 0.0
        %1633 = vmatpush.xpose.msra.mxu0 0.0
        %1634 = vmatpush.xpose.msra.mxu0 0.0
        %1635 = vmatpush.xpose.msra.mxu0 0.0
        %1636 = vmatpush.xpose.msra.mxu0 0.0
        %1637 = vmatpush.xpose.msra.mxu0 0.0
        %1638 = vmatpush.xpose.msra.mxu0 0.0
        %1639 = vmatpush.xpose.msra.mxu0 0.0
        %1640 = vmatpush.xpose.msra.mxu0 0.0
        %1641 = vmatpush.xpose.msra.mxu0 %v1624
        %1642 = vmatmul.f32.gmra.mxu0 %v1622
        %v1643 = vpop.f32.mrf.mxu0
        %v1644 = vadd.f32 %v1010, %v1643
        %1645 = vdwg.mxu0
        %v1646 = vsel %vm1039, %v1644, -inf
        %1647 = vmax.xlane.f32.xlu0 %v1646
        %v1648 = vpop.xlane.xlu0 %1647
        %v1649 = vsub.f32 %v1644, %v1648
        %v1650 = vmul.f32 %v1649, 1.442695
        %v1651 = vpow.pop %v1650
        %v1652 = vsel %vm1039, %v1651, 0.0
        %1653 = vadd.xlane.f32.xlu0 %v1652
        %v1654 = vpop.xlane.xlu0 %1653
        %v1655 = vrcp.pop %v1654
        %v1656 = vmul.f32 %v1651, %v1655
        %1657 = vrot.lane.b32.xlu0 %v1490, 96
        %v1658 = vpop.permute.xlu0 %1657
        %v1661 = vsel %vm1039, %v1656, 0
        %1663 = vmatpush.msra.mxu0 0.0
        %1664 = vmatpush.msra.mxu0 0.0
        %1665 = vmatpush.msra.mxu0 0.0
        %1666 = vmatpush.msra.mxu0 0.0
        %1667 = vmatpush.msra.mxu0 0.0
        %1668 = vmatpush.msra.mxu0 0.0
        %1669 = vmatpush.msra.mxu0 0.0
        %1670 = vmatpush.msra.mxu0 0.0
        %1671 = vmatpush.msra.mxu0 0.0
        %1672 = vmatpush.msra.mxu0 0.0
        %1673 = vmatpush.msra.mxu0 0.0
        %1674 = vmatpush.msra.mxu0 0.0
        %1675 = vmatpush.msra.mxu0 0.0
        %1676 = vmatpush.msra.mxu0 0.0
        %1677 = vmatpush.msra.mxu0 0.0
        %1678 = vmatpush.msra.mxu0 %v1658
        %1679 = vmatmul.f32.gmra.mxu0 %v1661
        %v1680 = vpop.f32.mrf.mxu0
        %v1681 = vadd.f32 0.0, %v1680
        %1682 = vdwg.mxu0
        %1684 = vrot.lane.b32.xlu0 %v1616, 16
        %v1685 = vpop.permute.xlu0 %1684
        %1688 = vrot.lane.b32.xlu0 %v1681, 32
        %v1689 = vpop.permute.xlu0 %1688
        %v1691 = vsel %vm1012, %v1550, %v1685
        %v1692 = vsel %vm1214, %v1691, %v1689
        %s1693 = scalar_lea.vmem [#allocation2], 48
        %v1694 = vld [vmem:[%s1693] sm:$0xff]
        %v1695 = vld [vmem:[%s1693 + $0x8] sm:$0xff]
        %v1696 = vld [vmem:[%s1693 + $0x10] sm:$0xff]
        %v1697 = vld [vmem:[%s1693 + $0x18] sm:$0xff]
        %v1698 = vld [vmem:[%s1693 + $0x20] sm:$0xff]
        %v1699 = vld [vmem:[%s1693 + $0x28] sm:$0xff]
        %v1701 = vsel %vm878, %v1692, 0
        %1703 = vmatpush.msra.mxu0 0.0
        %1704 = vmatpush.msra.mxu0 0.0
        %1705 = vmatpush.msra.mxu0 0.0
        %1706 = vmatpush.msra.mxu0 0.0
        %1707 = vmatpush.msra.mxu0 0.0
        %1708 = vmatpush.msra.mxu0 0.0
        %1709 = vmatpush.msra.mxu0 0.0
        %1710 = vmatpush.msra.mxu0 0.0
        %1711 = vmatpush.msra.mxu0 0.0
        %1712 = vmatpush.msra.mxu0 0.0
        %1713 = vmatpush.msra.mxu0 %v1699
        %1714 = vmatpush.msra.mxu0 %v1698
        %1715 = vmatpush.msra.mxu0 %v1697
        %1716 = vmatpush.msra.mxu0 %v1696
        %1717 = vmatpush.msra.mxu0 %v1695
        %1718 = vmatpush.msra.mxu0 %v1694
        %1719 = vmatmul.f32.gmra.mxu0 %v1701
        %v1720 = vpop.f32.mrf.mxu0
        %v1721 = vadd.f32 0.0, %v1720
        %1722 = vdwg.mxu0
        %v1723 = vadd.f32 %v1358, %v1721
        %s1724 = scalar_lea.vmem %s13, 1
        %v1725 = vld [vmem:[%s1724] sm:$0x1]
        %v1727 = vperm.slane %v1725, 0
        %v1729 = vadd.f32 %v1723, %v1727
        %s1730 = scalar_lea.vmem %s14, 1
        %v1731 = vld [vmem:[%s1730] sm:$0x1]
        %s1732 = scalar_lea.vmem %s15, 1
        %v1733 = vld [vmem:[%s1732] sm:$0x1]
        %v1734 = vsel %vm878, %v1729, 0.0
        %1735 = vadd.xlane.f32.xlu0 %v1734
        %v1736 = vpop.xlane.xlu0 %1735
        %v1737 = vmul.f32 %v1736, %v888
        %v1738 = vsub.f32 %v1729, %v1737
        %v1739 = vmul.f32 %v1738, %v1738
        %v1740 = vsel %vm878, %v1739, 0.0
        %1741 = vadd.xlane.f32.xlu0 %v1740
        %v1742 = vpop.xlane.xlu0 %1741
        %v1743 = vmul.f32 %v1742, 0.021276595
        %v1745 = vperm.slane %v1731, 0
        %v1747 = vmul.f32 %v1745, %v1738
        %v1748 = vadd.f32 %v1743, 1e-06
        %v1749 = vrsqrt.pop %v1748
        %v1750 = vmul.f32 %v1749, %v1748
        %v1751 = vmul.f32 %v1750, %v1749
        %v1752 = vmul.f32 0.5, %v1751
        %v1753 = vsub.f32 1.5, %v1752
        %v1754 = vmul.f32 %v1749, %v1753
        %vm1755 = vweird.f32 %v1748
        %vm1756 = vweird.f32 %v1749
        %vm1757 = vmor %vm1755, %vm1756
        %v1758 = vsel %vm1757, %v1749, %v1754
        %v1759 = vmul.f32 %v1747, %v1758
        %v1761 = vperm.slane %v1733, 0
        %v1763 = vadd.f32 %v1759, %v1761
        %s1764 = scalar_lea.vmem [#allocation5], 48
        %v1765 = vld [vmem:[%s1764] sm:$0xff]
        %v1766 = vld [vmem:[%s1764 + $0x8] sm:$0xff]
        %v1767 = vld [vmem:[%s1764 + $0x10] sm:$0xff]
        %v1768 = vld [vmem:[%s1764 + $0x18] sm:$0xff]
        %v1769 = vld [vmem:[%s1764 + $0x20] sm:$0xff]
        %v1770 = vld [vmem:[%s1764 + $0x28] sm:$0xff]
        %s1771 = scalar_lea.vmem %s17, 1
        %v1772 = vld [vmem:[%s1771] sm:$0x1]
        %v1774 = vperm.slane %v1772, 0
        %v1777 = vsel %vm878, %v1763, 0
        %1779 = vmatpush.msra.mxu0 0.0
        %1780 = vmatpush.msra.mxu0 0.0
        %1781 = vmatpush.msra.mxu0 0.0
        %1782 = vmatpush.msra.mxu0 0.0
        %1783 = vmatpush.msra.mxu0 0.0
        %1784 = vmatpush.msra.mxu0 0.0
        %1785 = vmatpush.msra.mxu0 0.0
        %1786 = vmatpush.msra.mxu0 0.0
        %1787 = vmatpush.msra.mxu0 0.0
        %1788 = vmatpush.msra.mxu0 0.0
        %1789 = vmatpush.msra.mxu0 %v1770
        %1790 = vmatpush.msra.mxu0 %v1769
        %1791 = vmatpush.msra.mxu0 %v1768
        %1792 = vmatpush.msra.mxu0 %v1767
        %1793 = vmatpush.msra.mxu0 %v1766
        %1794 = vmatpush.msra.mxu0 %v1765
        %1795 = vmatmul.f32.gmra.mxu0 %v1777
        %v1796 = vpop.f32.mrf.mxu0
        %v1797 = vadd.f32 %v1774, %v1796
        %1798 = vdwg.mxu0
        %v1799 = vmax.f32 %v1797, 0.0
        %s1800 = scalar_lea.vmem %s18, 96
        %v1801 = vld [vmem:[%s1800] sm:$0xff]
        %v1802 = vld [vmem:[%s1800 + $0x8] sm:$0xff]
        %v1803 = vld [vmem:[%s1800 + $0x10] sm:$0xff]
        %v1804 = vld [vmem:[%s1800 + $0x18] sm:$0xff]
        %v1805 = vld [vmem:[%s1800 + $0x20] sm:$0xff]
        %v1806 = vld [vmem:[%s1800 + $0x28] sm:$0xff]
        %v1807 = vld [vmem:[%s1800 + $0x30] sm:$0xff]
        %v1808 = vld [vmem:[%s1800 + $0x38] sm:$0xff]
        %v1809 = vld [vmem:[%s1800 + $0x40] sm:$0xff]
        %v1810 = vld [vmem:[%s1800 + $0x48] sm:$0xff]
        %v1811 = vld [vmem:[%s1800 + $0x50] sm:$0xff]
        %v1812 = vld [vmem:[%s1800 + $0x58] sm:$0xff]
        %v1814 = vsel %vm1329, %v1799, 0
        %1816 = vmatpush.msra.mxu0 0.0
        %1817 = vmatpush.msra.mxu0 0.0
        %1818 = vmatpush.msra.mxu0 0.0
        %1819 = vmatpush.msra.mxu0 0.0
        %1820 = vmatpush.msra.mxu0 %v1812
        %1821 = vmatpush.msra.mxu0 %v1811
        %1822 = vmatpush.msra.mxu0 %v1810
        %1823 = vmatpush.msra.mxu0 %v1809
        %1824 = vmatpush.msra.mxu0 %v1808
        %1825 = vmatpush.msra.mxu0 %v1807
        %1826 = vmatpush.msra.mxu0 %v1806
        %1827 = vmatpush.msra.mxu0 %v1805
        %1828 = vmatpush.msra.mxu0 %v1804
        %1829 = vmatpush.msra.mxu0 %v1803
        %1830 = vmatpush.msra.mxu0 %v1802
        %1831 = vmatpush.msra.mxu0 %v1801
        %1832 = vmatmul.f32.gmra.mxu0 %v1814
        %v1833 = vpop.f32.mrf.mxu0
        %v1834 = vadd.f32 0.0, %v1833
        %1835 = vdwg.mxu0
        %v1836 = vadd.f32 %v1729, %v1834
        %s1837 = scalar_lea.vmem %s19, 1
        %v1838 = vld [vmem:[%s1837] sm:$0x1]
        %v1840 = vperm.slane %v1838, 0
        %v1842 = vadd.f32 %v1836, %v1840
        %v1843 = vld [vmem:[%s20] sm:$0x1]
        %v1844 = vld [vmem:[%s21] sm:$0x1]
        %v1845 = vsel %vm878, %v1842, 0.0
        %1846 = vadd.xlane.f32.xlu0 %v1845
        %v1847 = vpop.xlane.xlu0 %1846
        %v1848 = vmul.f32 %v1847, %v888
        %v1849 = vsub.f32 %v1842, %v1848
        %v1850 = vmul.f32 %v1849, %v1849
        %v1851 = vsel %vm878, %v1850, 0.0
        %1852 = vadd.xlane.f32.xlu0 %v1851
        %v1853 = vpop.xlane.xlu0 %1852
        %v1854 = vmul.f32 %v1853, 0.021276595
        %v1856 = vperm.slane %v1843, 0
        %v1858 = vmul.f32 %v1856, %v1849
        %v1859 = vadd.f32 %v1854, 1e-06
        %v1860 = vrsqrt.pop %v1859
        %v1861 = vmul.f32 %v1860, %v1859
        %v1862 = vmul.f32 %v1861, %v1860
        %v1863 = vmul.f32 0.5, %v1862
        %v1864 = vsub.f32 1.5, %v1863
        %v1865 = vmul.f32 %v1860, %v1864
        %vm1866 = vweird.f32 %v1859
        %vm1867 = vweird.f32 %v1860
        %vm1868 = vmor %vm1866, %vm1867
        %v1869 = vsel %vm1868, %v1860, %v1865
        %v1870 = vmul.f32 %v1858, %v1869
        %v1872 = vperm.slane %v1844, 0
        %v1874 = vadd.f32 %v1870, %v1872
        %1875 = vst.msk [vmem:[%s804] sm:$0xff] %vm878, %v1874
        %v1876 = vld [vmem:[%s22] sm:$0xff]
        %v1877 = vld [vmem:[%s22 + $0x8] sm:$0xff]
        %v1878 = vld [vmem:[%s22 + $0x10] sm:$0xff]
        %v1879 = vld [vmem:[%s22 + $0x18] sm:$0xff]
        %v1880 = vld [vmem:[%s22 + $0x20] sm:$0xff]
        %v1881 = vld [vmem:[%s22 + $0x28] sm:$0xff]
        %v1882 = vld [vmem:[%s23] sm:$0x1]
        %v1884 = vsel %vm878, %v1874, 0
        %1886 = vmatpush.msra.mxu0 0.0
        %1887 = vmatpush.msra.mxu0 0.0
        %1888 = vmatpush.msra.mxu0 0.0
        %1889 = vmatpush.msra.mxu0 0.0
        %1890 = vmatpush.msra.mxu0 0.0
        %1891 = vmatpush.msra.mxu0 0.0
        %1892 = vmatpush.msra.mxu0 0.0
        %1893 = vmatpush.msra.mxu0 0.0
        %1894 = vmatpush.msra.mxu0 0.0
        %1895 = vmatpush.msra.mxu0 0.0
        %1896 = vmatpush.msra.mxu0 %v1881
        %1897 = vmatpush.msra.mxu0 %v1880
        %1898 = vmatpush.msra.mxu0 %v1879
        %1899 = vmatpush.msra.mxu0 %v1878
        %1900 = vmatpush.msra.mxu0 %v1877
        %1901 = vmatpush.msra.mxu0 %v1876
        %1902 = vmatmul.f32.gmra.mxu0 %v1884
        %v1903 = vpop.f32.mrf.mxu0
        %v1904 = vadd.f32 %v1882, %v1903
        %1905 = vdwg.mxu0
        %1906 = vst [vmem:[%s810] sm:$0x1] %v1904
        %s1907 = sand.u32 %s567, 1
        %s1908 = scalar_lea.sflag [#allocation4], %s1907
        %s1909 = sand.u32 %s567, 1
        %s1910 = smul.addr %s1909, 8
        %s1911 = scalar_lea.vmem [#allocation7], %s1910
        %s1912 = sand.u32 %s593, 1
        %s1913 = scalar_lea.sflag [#allocation9], %s1912
        %s1914 = sand.u32 %s593, 1
        %s1915 = scalar_lea.vmem [#allocation8], %s1914
        // Predicated region
        $region125: #{tpu_custom_call.1} parent=115 // pred_check
          %p1916 = pneg %p577
        $region126: #{tpu_custom_call.1} parent=115 // pred_check_branch
          %1918 = sbr.rel (%p1916) target = $region128
        $region127: #{tpu_custom_call.1} parent=115 // pred_region
          %1920 = vsyncadd %s1908, 0
          %s1921 = smul.addr %s45, 8
          %s1922 = scalar_lea.hbm %s24, %s1921
          %s1924 = sshll.u32 %s1911, 4
          %s1925 = int_to_ptr.vmem [resolvable:$true] %s1924
          %s1926 = sshll.u32 %s1922, 4
          %s1927 = int_to_ptr.hbm [resolvable:$true] %s1926
          %1929 = dma.vmem_to_hbm [thread:$0]  %s1925, 128, %s1927, %s1908
        $region128: #{tpu_custom_call.1} parent=115 // pred_fallthru
          _
        // Predicated region
        $region129: #{tpu_custom_call.1} parent=115 // pred_check
          %p1930 = pneg %p603
        $region130: #{tpu_custom_call.1} parent=115 // pred_check_branch
          %1932 = sbr.rel (%p1930) target = $region132
        $region131: #{tpu_custom_call.1} parent=115 // pred_region
          %1934 = vsyncadd %s1913, 0
          %s1935 = scalar_lea.hbm %s25, %s45
          %s1937 = sshll.u32 %s1915, 4
          %s1938 = int_to_ptr.vmem [resolvable:$true] %s1937
          %s1939 = sshll.u32 %s1935, 4
          %s1940 = int_to_ptr.hbm [resolvable:$true] %s1939
          %1942 = dma.vmem_to_hbm [thread:$0]  %s1938, 16, %s1940, %s1913
        $region132: #{tpu_custom_call.1} parent=115 // pred_fallthru
          _
      $region116: #{tpu_custom_call.1} parent=5 // pred_fallthru
        _
      %p1943 = scmp.le.s32.totalorder 2, %s40
      // Predicated region
      $region133: #{tpu_custom_call.1} parent=5 // pred_check
        %p1944 = pneg %p1943
      $region134: #{tpu_custom_call.1} parent=5 // pred_check_branch
        %1946 = sbr.rel (%p1944) target = $region136
      $region135: #{tpu_custom_call.1} parent=5 // pred_region
        %s1947 = ssub.s32 %s40, 2
        // Predicated region
        $region137: #{tpu_custom_call.1} parent=135 // pred_check
          %p1948 = pneg %p583
        $region138: #{tpu_custom_call.1} parent=135 // pred_check_branch
          %1950 = sbr.rel (%p1948) target = $region140
        $region139: #{tpu_custom_call.1} parent=135 // pred_region
          %s1951 = sand.u32 %s568, 1
          %s1952 = scalar_lea.sflag [#allocation4], %s1951
          %s1953 = sand.u32 %s568, 1
          %s1954 = smul.addr %s1953, 8
          %s1955 = scalar_lea.vmem [#allocation7], %s1954
          %1957 = dma.done %s1952, 128
        $region140: #{tpu_custom_call.1} parent=135 // pred_fallthru
          _
        // Predicated region
        $region141: #{tpu_custom_call.1} parent=135 // pred_check
          %p1958 = pneg %p609
        $region142: #{tpu_custom_call.1} parent=135 // pred_check_branch
          %1960 = sbr.rel (%p1958) target = $region144
        $region143: #{tpu_custom_call.1} parent=135 // pred_region
          %s1961 = sand.u32 %s594, 1
          %s1962 = scalar_lea.sflag [#allocation9], %s1961
          %s1963 = sand.u32 %s594, 1
          %s1964 = scalar_lea.vmem [#allocation8], %s1963
          %1966 = dma.done %s1962, 16
        $region144: #{tpu_custom_call.1} parent=135 // pred_fallthru
          _
      $region136: #{tpu_custom_call.1} parent=5 // pred_fallthru
        _
    $region6: #{tpu_custom_call.1} parent=1 // loop_footer
      %s44 = sadd.s32 1, %s40
    $region7: #{tpu_custom_call.1} parent=1 // loop_footer_branch
      %39 = sbr.rel target = $region3
    $region8: #{tpu_custom_call.1} parent=1 // loop_exit
      _
    %1967 = vsyncpa [#allocation3], 1
    %s1968 = scalar_lea.sflag [#allocation3], 1
    %1969 = vsyncpa %s1968, 1
    %1970 = vsyncpa [#allocation6], 1
    %1971 = vsyncpa [#allocation4], 1
    %s1972 = scalar_lea.sflag [#allocation4], 1
    %1973 = vsyncpa %s1972, 1
    %1974 = vsyncpa [#allocation9], 1
    %s1975 = scalar_lea.sflag [#allocation9], 1
    %1976 = vsyncpa %s1975, 1

</llo_original>
